<compile_context>
chip_gen: v6e
topology: v6e:2x2x1
jax: 0.10.0
libtpu: 0.0.40
codegen_flags: <defaults>
</compile_context>

<pallas_src>
import functools

import jax
import jax.numpy as jnp
from jax import lax
from jax.experimental import pallas as pl
from jax.experimental.pallas import tpu as pltpu

HIDDEN = 32   # A3TGCN out_channels
LANES = 128   # final Linear output padded to a full lane tile (unmasked stores)


def _round_up8(v):
    return ((v + 7) // 8) * 8


def _slab_layout(num_nodes, node_features, hidden, periods):
    """Row offsets of each parameter inside the packed (rows, 128) f32 slab."""
    del periods  # layout does not depend on P (P only bounds the wlin/blin columns)
    h2 = 2 * hidden
    a = 0
    wzh = a + _round_up8(num_nodes)
    bzh = wzh + _round_up8(node_features)
    wl = bzh + 8
    bl = wl + _round_up8(h2)
    wlin = bl + 8
    blin = wlin + _round_up8(hidden)
    rows = blin + 8
    return dict(a=a, wzh=wzh, bzh=bzh, wl=wl, bl=bl, wlin=wlin, blin=blin, rows=rows)


def _temporal_gnn_kernel(x_ref, probs_ref, slab_ref, out_ref, *, n, f, p, lay):
    h2 = 2 * HIDDEN
    # --- one weight DMA: every static parameter lives in the packed slab ------
    a = slab_ref[lay["a"]:lay["a"] + n, 0:n]                # (N, N)   normalized adjacency
    wzh = slab_ref[lay["wzh"]:lay["wzh"] + f, 0:h2]         # (F, 64)  [Wz | Wh]
    bzh = slab_ref[lay["bzh"]:lay["bzh"] + 1, 0:h2]         # (1, 64)  [bz | bh]
    wl = slab_ref[lay["wl"]:lay["wl"] + h2, 0:h2]           # (64, 64) blockdiag(Wlz,Wlh)*scale
    bl = slab_ref[lay["bl"]:lay["bl"] + 1, 0:h2]            # (1, 64)  [blz|blh]*scale
    wlin = slab_ref[lay["wlin"]:lay["wlin"] + HIDDEN, :]    # (32, 128) final Linear (zero-padded)
    blin = slab_ref[lay["blin"]:lay["blin"] + 1, :]         # (1, 128)

    # GCNConv feature transform for z- & h-branches of ALL periods at once.
    xw = jnp.dot(x_ref[...], wzh, preferred_element_type=jnp.float32)      # (P*N, 64)

    # Propagation with the shared (N, N) adjacency, batched over periods
    # (replaces the 87.5%-zero kron(I_P, A) matmul).
    xw3 = xw.reshape(p, n, h2)                                             # free view
    a3 = jnp.broadcast_to(a[None, :, :], (p, n, n))
    c3 = lax.dot_general(a3, xw3, (((2,), (1,)), ((0,), (0,))),
                         preferred_element_type=jnp.float32)               # (P, N, 64)
    c = c3.reshape(p * n, h2) + bzh                                        # (P*N, 64)

    # TGCN gate linears.  The gate scale ([-1]*32 ++ [2]*32) was folded into wl/bl
    # at prepare time, so a SINGLE sigmoid over the full 64-lane tile gives both gates:
    #   s[:, :32] = sigmoid(-gz) = 1 - Z ,  s[:, 32:] = sigmoid(2*gh)
    #   Ht = (1 - Z) * tanh(gh) = s[:, :32] * (2*s[:, 32:] - 1)        (H == 0)
    g = jnp.dot(c, wl, preferred_element_type=jnp.float32) + bl            # (P*N, 64)
    s = jax.nn.sigmoid(g)
    h = s[:, :HIDDEN] * (2.0 * s[:, HIDDEN:] - 1.0)                        # (P*N, 32)

    # Attention-weighted sum over periods: SMEM scalar * vreg multiply-adds (VPU).
    h3 = h.reshape(p, n, HIDDEN)
    hacc = probs_ref[0] * h3[0]
    for t in range(1, p):
        hacc = hacc + probs_ref[t] * h3[t]

    # ReLU + final Linear(32 -> P), padded to 128 output lanes -> unmasked stores.
    hf = jnp.maximum(hacc, 0.0)
    out_ref[...] = jnp.dot(hf, wlin, preferred_element_type=jnp.float32) + blin


def gcn_norm_dense(edge_index, num_nodes):
    """Dense GCN-normalized adjacency: add REMAINING self loops, D^-1/2 (A+I) D^-1/2.

    Returns A such that GCNConv propagation == A @ X (flow: source_to_target)."""
    src, dst = edge_index[0], edge_index[1]
    w = jnp.ones(src.shape[0], jnp.float32)
    adj = jnp.zeros((num_nodes, num_nodes), jnp.float32).at[dst, src].add(w)
    # PyG add_remaining_self_loops: only add a loop where one is absent.
    diag = jnp.diagonal(adj)
    adj = adj + jnp.diag(jnp.where(diag == 0, 1.0, 0.0))
    deg = adj.sum(axis=1)
    dinv = jnp.where(deg > 0, 1.0 / jnp.sqrt(deg), 0.0)
    return dinv[:, None] * adj * dinv[None, :]


def init_params(key, node_features, periods):
    # Reset-gate parameters of the full TGCN are omitted: with H identically zero
    # (A3TGCN with H=None) the reset gate is provably a no-op.
    ks = jax.random.split(key, 12)
    s = 0.1
    return dict(
        attention=jax.random.uniform(ks[0], (periods,), jnp.float32),
        wz=s * jax.random.normal(ks[1], (node_features, HIDDEN), jnp.float32),
        wh=s * jax.random.normal(ks[2], (node_features, HIDDEN), jnp.float32),
        bz=s * jax.random.normal(ks[3], (1, HIDDEN), jnp.float32),
        bh=s * jax.random.normal(ks[4], (1, HIDDEN), jnp.float32),
        wlz=s * jax.random.normal(ks[5], (HIDDEN, HIDDEN), jnp.float32),
        wlh=s * jax.random.normal(ks[6], (HIDDEN, HIDDEN), jnp.float32),
        blz=s * jax.random.normal(ks[7], (1, HIDDEN), jnp.float32),
        blh=s * jax.random.normal(ks[8], (1, HIDDEN), jnp.float32),
        wlin=s * jax.random.normal(ks[9], (HIDDEN, periods), jnp.float32),  # (in, out)
        blin=s * jax.random.normal(ks[10], (1, periods), jnp.float32),
    )


def prepare_temporal_gnn(params, edge_index, num_nodes, node_features, periods):
    """Param/graph-static preparation.  Run ONCE and cache the result — everything
    here depends only on params and edge_index, never on x."""
    assert periods <= LANES
    lay = _slab_layout(num_nodes, node_features, HIDDEN, periods)

    a_norm = gcn_norm_dense(edge_index, num_nodes)                       # (N, N)
    probs = jax.nn.softmax(params["attention"]).astype(jnp.float32)      # (P,)

    w_zh = jnp.concatenate([params["wz"], params["wh"]], axis=1)         # (F, 64)
    b_zh = jnp.concatenate([params["bz"], params["bh"]], axis=1)         # (1, 64)
    zeros = jnp.zeros((HIDDEN, HIDDEN), jnp.float32)
    wl_bd = jnp.block([[params["wlz"], zeros], [zeros, params["wlh"]]])  # (64, 64)
    bl_zh = jnp.concatenate([params["blz"], params["blh"]], axis=1)      # (1, 64)

    # Fold the single-sigmoid rewrite into the gate weights/bias:
    #   1 - sigmoid(x) = sigmoid(-x)      (z gate, scale -1)
    #   tanh(x) = 2*sigmoid(2x) - 1       (candidate gate, scale 2)
    gate_scale = jnp.concatenate(
        [jnp.full((HIDDEN,), -1.0, jnp.float32), jnp.full((HIDDEN,), 2.0, jnp.float32)])
    wl_s = wl_bd * gate_scale[None, :]
    bl_s = bl_zh * gate_scale[None, :]

    slab = jnp.zeros((lay["rows"], LANES), jnp.float32)

    def put(buf, row, arr):
        r, c = arr.shape
        return buf.at[row:row + r, 0:c].set(arr.astype(jnp.float32))

    slab = put(slab, lay["a"], a_norm)
    slab = put(slab, lay["wzh"], w_zh)
    slab = put(slab, lay["bzh"], b_zh)
    slab = put(slab, lay["wl"], wl_s)
    slab = put(slab, lay["bl"], bl_s)
    slab = put(slab, lay["wlin"], params["wlin"])   # zero-padded to 128 lanes
    slab = put(slab, lay["blin"], params["blin"])

    return dict(slab=slab, probs=probs)


@jax.jit
def temporal_gnn_forward(prepared, x):
    """x: (num_nodes, node_features, periods) — same convention as the PyTorch module."""
    n, f, p = x.shape
    lay = _slab_layout(n, f, HIDDEN, p)
    h2 = 2 * HIDDEN

    # Only x-dependent per-call transform: period-major row stacking (row t*N+i = node i @ t).
    x_all = jnp.transpose(x, (2, 0, 1)).reshape(p * n, f).astype(jnp.float32)

    flops = 2 * (p * n * f * h2 + p * n * n * h2 + p * n * h2 * h2 + n * HIDDEN * LANES)
    bytes_accessed = 4 * (p * n * f + lay["rows"] * LANES + p + n * LANES)

    out_pad = pl.pallas_call(
        functools.partial(_temporal_gnn_kernel, n=n, f=f, p=p, lay=lay),
        out_shape=jax.ShapeDtypeStruct((n, LANES), jnp.float32),
        in_specs=[
            pl.BlockSpec(memory_space=pltpu.MemorySpace.VMEM),   # x_all
            pl.BlockSpec(memory_space=pltpu.MemorySpace.SMEM),   # probs
            pl.BlockSpec(memory_space=pltpu.MemorySpace.VMEM),   # packed param slab
        ],
        out_specs=pl.BlockSpec(memory_space=pltpu.MemorySpace.VMEM),
        cost_estimate=pl.CostEstimate(
            flops=flops, transcendentals=p * n * h2, bytes_accessed=bytes_accessed),
    )(x_all, prepared["probs"], prepared["slab"])
    return out_pad[:, :p]


def temporal_gnn_reference(params, x, edge_index, num_nodes):
    """Pure-JAX reference (per-period loop, separate sigmoid/tanh) for correctness."""
    a = gcn_norm_dense(edge_index, num_nodes)
    probs = jax.nn.softmax(params["attention"])
    n, f, periods = x.shape
    hacc = jnp.zeros((n, HIDDEN), jnp.float32)
    for t in range(periods):
        xt = x[:, :, t].astype(jnp.float32)
        cz = a @ (xt @ params["wz"]) + params["bz"]
        ch = a @ (xt @ params["wh"]) + params["bh"]
        z = jax.nn.sigmoid(cz @ params["wlz"] + params["blz"])
        h_tilde = jnp.tanh(ch @ params["wlh"] + params["blh"])
        hacc = hacc + probs[t] * (1.0 - z) * h_tilde
    return jnp.maximum(hacc, 0.0) @ params["wlin"] + params["blin"]


if __name__ == "__main__":
    NUM_NODES = 16
    NODE_FEATURES = 4
    PERIODS = 8

    key = jax.random.PRNGKey(0)
    k_x, k_p = jax.random.split(key)

    # Node features for T time steps: (N, F, periods), as in the PyTorch module.
    x = jax.random.normal(k_x, (NUM_NODES, NODE_FEATURES, PERIODS), jnp.float32)

    # Simple undirected ring graph as edge_index (2, E).
    i = jnp.arange(NUM_NODES, dtype=jnp.int32)
    src = jnp.concatenate([i, (i + 1) % NUM_NODES])
    dst = jnp.concatenate([(i + 1) % NUM_NODES, i])
    edge_index = jnp.stack([src, dst], axis=0)

    params = init_params(k_p, NODE_FEATURES, PERIODS)

    # Static prep runs ONCE (cache this across calls); only x flows through the jit.
    prepared = prepare_temporal_gnn(params, edge_index, NUM_NODES, NODE_FEATURES, PERIODS)
    prepared = jax.tree_util.tree_map(jax.block_until_ready, prepared)

    out = temporal_gnn_forward(prepared, x)
    out = jax.block_until_ready(out)
    assert out.shape == (NUM_NODES, PERIODS)
    assert jnp.isfinite(out).all()

    ref = temporal_gnn_reference(params, x, edge_index, NUM_NODES)
    assert jnp.allclose(out, ref, rtol=1e-4, atol=1e-5), float(jnp.max(jnp.abs(out - ref)))
    print("KERNEL_OK")
</pallas_src>

<mosaic_0001>
module attributes {stable_mosaic.version = 11 : i64} {
  func.func @_temporal_gnn_kernel(%arg0: memref<128x4xf32, #tpu.memory_space<vmem>>, %arg1: memref<8xf32, #tpu.memory_space<smem>>, %arg2: memref<144x128xf32, #tpu.memory_space<vmem>>, %arg3: memref<16x128xf32, #tpu.memory_space<vmem>>) attributes {dimension_semantics = [], scalar_prefetch = 0 : i64, scratch_operands = 0 : i64, tpu.core_type = #tpu.core_type<tc>} {
    %c0 = arith.constant 0 : index
    %c0_0 = arith.constant 0 : index
    %0 = vector.load %arg2[%c0, %c0_0] : memref<144x128xf32, #tpu.memory_space<vmem>>, vector<16x16xf32>
    %c16 = arith.constant 16 : index
    %c0_1 = arith.constant 0 : index
    %1 = vector.load %arg2[%c16, %c0_1] : memref<144x128xf32, #tpu.memory_space<vmem>>, vector<4x64xf32>
    %c24 = arith.constant 24 : index
    %c0_2 = arith.constant 0 : index
    %2 = vector.load %arg2[%c24, %c0_2] : memref<144x128xf32, #tpu.memory_space<vmem>>, vector<1x64xf32>
    %c32 = arith.constant 32 : index
    %c0_3 = arith.constant 0 : index
    %3 = vector.load %arg2[%c32, %c0_3] : memref<144x128xf32, #tpu.memory_space<vmem>>, vector<64x64xf32>
    %c96 = arith.constant 96 : index
    %c0_4 = arith.constant 0 : index
    %4 = vector.load %arg2[%c96, %c0_4] : memref<144x128xf32, #tpu.memory_space<vmem>>, vector<1x64xf32>
    %c104 = arith.constant 104 : index
    %c0_5 = arith.constant 0 : index
    %5 = vector.load %arg2[%c104, %c0_5] : memref<144x128xf32, #tpu.memory_space<vmem>>, vector<32x128xf32>
    %c136 = arith.constant 136 : index
    %c0_6 = arith.constant 0 : index
    %6 = vector.load %arg2[%c136, %c0_6] : memref<144x128xf32, #tpu.memory_space<vmem>>, vector<1x128xf32>
    %c0_7 = arith.constant 0 : index
    %c0_8 = arith.constant 0 : index
    %7 = vector.load %arg0[%c0_7, %c0_8] : memref<128x4xf32, #tpu.memory_space<vmem>>, vector<128x4xf32>
    %cst = arith.constant dense<0.000000e+00> : vector<128x64xf32>
    %8 = tpu.matmul %7, %1, %cst {dimension_numbers = #tpu.dot_dimension_numbers<[1], [0], [0], [1], [0, 0, 1, 1], [], []>} : vector<128x4xf32>, vector<4x64xf32>, vector<128x64xf32> -> vector<128x64xf32>
    %9 = vector.shape_cast %8 : vector<128x64xf32> to vector<8x16x64xf32>
    %10 = vector.shape_cast %0 : vector<16x16xf32> to vector<1x16x16xf32>
    %11 = vector.shape_cast %10 : vector<1x16x16xf32> to vector<1x16x16xf32>
    %12 = vector.broadcast %11 : vector<1x16x16xf32> to vector<8x16x16xf32>
    %cst_9 = arith.constant dense<0.000000e+00> : vector<8x16x64xf32>
    %13 = tpu.matmul %12, %9, %cst_9 {dimension_numbers = #tpu.dot_dimension_numbers<[2], [1], [1], [2], [0, 0, 0, 1, 1, 2], [0], [0]>} : vector<8x16x16xf32>, vector<8x16x64xf32>, vector<8x16x64xf32> -> vector<8x16x64xf32>
    %14 = vector.shape_cast %13 : vector<8x16x64xf32> to vector<128x64xf32>
    %15 = vector.broadcast %2 : vector<1x64xf32> to vector<128x64xf32>
    %16 = arith.addf %14, %15 : vector<128x64xf32>
    %cst_10 = arith.constant dense<0.000000e+00> : vector<128x64xf32>
    %17 = tpu.matmul %16, %3, %cst_10 {dimension_numbers = #tpu.dot_dimension_numbers<[1], [0], [0], [1], [0, 0, 1, 1], [], []>} : vector<128x64xf32>, vector<64x64xf32>, vector<128x64xf32> -> vector<128x64xf32>
    %18 = vector.broadcast %4 : vector<1x64xf32> to vector<128x64xf32>
    %19 = arith.addf %17, %18 : vector<128x64xf32>
    %20 = arith.negf %19 : vector<128x64xf32>
    %21 = math.exp %20 : vector<128x64xf32>
    %cst_11 = arith.constant 1.000000e+00 : f32
    %22 = vector.broadcast %cst_11 : f32 to vector<128x64xf32>
    %23 = arith.addf %22, %21 : vector<128x64xf32>
    %24 = arith.divf %22, %23 : vector<128x64xf32>
    %25 = vector.extract_strided_slice %24 {offsets = [0, 0], sizes = [128, 32], strides = [1, 1]} : vector<128x64xf32> to vector<128x32xf32>
    %26 = vector.extract_strided_slice %24 {offsets = [0, 32], sizes = [128, 32], strides = [1, 1]} : vector<128x64xf32> to vector<128x32xf32>
    %cst_12 = arith.constant 2.000000e+00 : f32
    %27 = vector.broadcast %cst_12 : f32 to vector<128x32xf32>
    %28 = arith.mulf %27, %26 : vector<128x32xf32>
    %cst_13 = arith.constant 1.000000e+00 : f32
    %29 = vector.broadcast %cst_13 : f32 to vector<128x32xf32>
    %30 = arith.subf %28, %29 : vector<128x32xf32>
    %31 = arith.mulf %25, %30 : vector<128x32xf32>
    %32 = vector.shape_cast %31 : vector<128x32xf32> to vector<8x16x32xf32>
    %c0_14 = arith.constant 0 : index
    %33 = memref.load %arg1[%c0_14] : memref<8xf32, #tpu.memory_space<smem>>
    %34 = vector.extract_strided_slice %32 {offsets = [0, 0, 0], sizes = [1, 16, 32], strides = [1, 1, 1]} : vector<8x16x32xf32> to vector<1x16x32xf32>
    %35 = vector.shape_cast %34 : vector<1x16x32xf32> to vector<16x32xf32>
    %36 = vector.broadcast %33 : f32 to vector<16x32xf32>
    %37 = arith.mulf %36, %35 : vector<16x32xf32>
    %c1 = arith.constant 1 : index
    %38 = memref.load %arg1[%c1] : memref<8xf32, #tpu.memory_space<smem>>
    %39 = vector.extract_strided_slice %32 {offsets = [1, 0, 0], sizes = [1, 16, 32], strides = [1, 1, 1]} : vector<8x16x32xf32> to vector<1x16x32xf32>
    %40 = vector.shape_cast %39 : vector<1x16x32xf32> to vector<16x32xf32>
    %41 = vector.broadcast %38 : f32 to vector<16x32xf32>
    %42 = arith.mulf %41, %40 : vector<16x32xf32>
    %43 = arith.addf %37, %42 : vector<16x32xf32>
    %c2 = arith.constant 2 : index
    %44 = memref.load %arg1[%c2] : memref<8xf32, #tpu.memory_space<smem>>
    %45 = vector.extract_strided_slice %32 {offsets = [2, 0, 0], sizes = [1, 16, 32], strides = [1, 1, 1]} : vector<8x16x32xf32> to vector<1x16x32xf32>
    %46 = vector.shape_cast %45 : vector<1x16x32xf32> to vector<16x32xf32>
    %47 = vector.broadcast %44 : f32 to vector<16x32xf32>
    %48 = arith.mulf %47, %46 : vector<16x32xf32>
    %49 = arith.addf %43, %48 : vector<16x32xf32>
    %c3 = arith.constant 3 : index
    %50 = memref.load %arg1[%c3] : memref<8xf32, #tpu.memory_space<smem>>
    %51 = vector.extract_strided_slice %32 {offsets = [3, 0, 0], sizes = [1, 16, 32], strides = [1, 1, 1]} : vector<8x16x32xf32> to vector<1x16x32xf32>
    %52 = vector.shape_cast %51 : vector<1x16x32xf32> to vector<16x32xf32>
    %53 = vector.broadcast %50 : f32 to vector<16x32xf32>
    %54 = arith.mulf %53, %52 : vector<16x32xf32>
    %55 = arith.addf %49, %54 : vector<16x32xf32>
    %c4 = arith.constant 4 : index
    %56 = memref.load %arg1[%c4] : memref<8xf32, #tpu.memory_space<smem>>
    %57 = vector.extract_strided_slice %32 {offsets = [4, 0, 0], sizes = [1, 16, 32], strides = [1, 1, 1]} : vector<8x16x32xf32> to vector<1x16x32xf32>
    %58 = vector.shape_cast %57 : vector<1x16x32xf32> to vector<16x32xf32>
    %59 = vector.broadcast %56 : f32 to vector<16x32xf32>
    %60 = arith.mulf %59, %58 : vector<16x32xf32>
    %61 = arith.addf %55, %60 : vector<16x32xf32>
    %c5 = arith.constant 5 : index
    %62 = memref.load %arg1[%c5] : memref<8xf32, #tpu.memory_space<smem>>
    %63 = vector.extract_strided_slice %32 {offsets = [5, 0, 0], sizes = [1, 16, 32], strides = [1, 1, 1]} : vector<8x16x32xf32> to vector<1x16x32xf32>
    %64 = vector.shape_cast %63 : vector<1x16x32xf32> to vector<16x32xf32>
    %65 = vector.broadcast %62 : f32 to vector<16x32xf32>
    %66 = arith.mulf %65, %64 : vector<16x32xf32>
    %67 = arith.addf %61, %66 : vector<16x32xf32>
    %c6 = arith.constant 6 : index
    %68 = memref.load %arg1[%c6] : memref<8xf32, #tpu.memory_space<smem>>
    %69 = vector.extract_strided_slice %32 {offsets = [6, 0, 0], sizes = [1, 16, 32], strides = [1, 1, 1]} : vector<8x16x32xf32> to vector<1x16x32xf32>
    %70 = vector.shape_cast %69 : vector<1x16x32xf32> to vector<16x32xf32>
    %71 = vector.broadcast %68 : f32 to vector<16x32xf32>
    %72 = arith.mulf %71, %70 : vector<16x32xf32>
    %73 = arith.addf %67, %72 : vector<16x32xf32>
    %c7 = arith.constant 7 : index
    %74 = memref.load %arg1[%c7] : memref<8xf32, #tpu.memory_space<smem>>
    %75 = vector.extract_strided_slice %32 {offsets = [7, 0, 0], sizes = [1, 16, 32], strides = [1, 1, 1]} : vector<8x16x32xf32> to vector<1x16x32xf32>
    %76 = vector.shape_cast %75 : vector<1x16x32xf32> to vector<16x32xf32>
    %77 = vector.broadcast %74 : f32 to vector<16x32xf32>
    %78 = arith.mulf %77, %76 : vector<16x32xf32>
    %79 = arith.addf %73, %78 : vector<16x32xf32>
    %cst_15 = arith.constant 0.000000e+00 : f32
    %80 = vector.broadcast %cst_15 : f32 to vector<16x32xf32>
    %81 = arith.maximumf %79, %80 : vector<16x32xf32>
    %cst_16 = arith.constant dense<0.000000e+00> : vector<16x128xf32>
    %82 = tpu.matmul %81, %5, %cst_16 {dimension_numbers = #tpu.dot_dimension_numbers<[1], [0], [0], [1], [0, 0, 1, 1], [], []>} : vector<16x32xf32>, vector<32x128xf32>, vector<16x128xf32> -> vector<16x128xf32>
    %83 = vector.broadcast %6 : vector<1x128xf32> to vector<16x128xf32>
    %84 = arith.addf %82, %83 : vector<16x128xf32>
    %c0_17 = arith.constant 0 : index
    %c0_18 = arith.constant 0 : index
    %85 = vector.load %arg3[%c0_17, %c0_18] : memref<16x128xf32, #tpu.memory_space<vmem>>, vector<16x128xf32>
    tpu.vector_store %arg3[%c0_17, %c0_18], %84 {strides = array<i32>} : memref<16x128xf32, #tpu.memory_space<vmem>>, vector<16x128xf32>,
    return
  }
}

</mosaic_0001>

<llo_original>
// kernel: temporal_gnn_forward.1
$region0: #{temporal_gnn_forward.1}
  #allocation0 [shape = 'u32[]', space=smem, size = 0x4, offset = 0x4, fixed_abs, tag = 'smem constant byte address 0x4 - core index']
  #allocation1 [shape = 'u32[144,128]{1,0:T(1,128)}', space=vmem, size = 0x12000, scoped, tag = 'internal scratch']
  %s0 = inlined_call_operand.vmem [shape: f32[128,4], index: 0, kind: input, shape index: {}]
  %s1 = inlined_call_operand.vmem [shape: f32[8], index: 1, kind: input, shape index: {}]
  %s2 = inlined_call_operand.vmem [shape: f32[144,128], index: 2, kind: input, shape index: {}]
  %s3 = inlined_call_operand.vmem [shape: f32[16,128], index: 3, kind: output, shape index: {}]
  %s4 = sld [smem:[#allocation0]]
  $region26: #{temporal_gnn_forward.1} parent=0
    _
  %s6 = ssub.s32 1, %s4
  %s7 = scalar_select 0, %s6, %s4
  $region1: #{temporal_gnn_forward.1} parent=0
    #allocation2 [shape = 'u8[512]{0}', space=smem, size = 0x200, scoped, tag = 'input window, operand 1, single buffered']
    #allocation3 [shape = 's32[1]{0}', space=sflag, size = 0x4, scoped, tag = 'scoped memory for temporal_gnn_forward.1']
    %8 = vsyncpa [#allocation3], 0
    // Predicated region
    $region2: #{temporal_gnn_forward.1} parent=1 // pred_check
      _
    $region3: #{temporal_gnn_forward.1} parent=1 // pred_check_branch
      %10 = sbr.rel (0) target = $region5
    $region4: #{temporal_gnn_forward.1} parent=1 // pred_region
      _
    $region5: #{temporal_gnn_forward.1} parent=1 // pred_fallthru
      _
    // Predicated region
    $region6: #{temporal_gnn_forward.1} parent=1 // pred_check
      _
    $region7: #{temporal_gnn_forward.1} parent=1 // pred_check_branch
      %12 = sbr.rel (0) target = $region9
    $region8: #{temporal_gnn_forward.1} parent=1 // pred_region
      %s14 = ssub.s32 16, 16
      %15 = vsyncadd [#allocation3], %s14
      %s17 = sshll.u32 %s1, 4
      %s18 = int_to_ptr.vmem [resolvable:$true] %s17
      %20 = dma.vmem_to_smem %s18, 16, [#allocation2], [#allocation3]
    $region9: #{temporal_gnn_forward.1} parent=1 // pred_fallthru
      _
    // Predicated region
    $region10: #{temporal_gnn_forward.1} parent=1 // pred_check
      _
    $region11: #{temporal_gnn_forward.1} parent=1 // pred_check_branch
      %22 = sbr.rel (0) target = $region13
    $region12: #{temporal_gnn_forward.1} parent=1 // pred_region
      _
    $region13: #{temporal_gnn_forward.1} parent=1 // pred_fallthru
      _
    // Predicated region
    $region14: #{temporal_gnn_forward.1} parent=1 // pred_check
      _
    $region15: #{temporal_gnn_forward.1} parent=1 // pred_check_branch
      %24 = sbr.rel (0) target = $region17
    $region16: #{temporal_gnn_forward.1} parent=1 // pred_region
      %25 = dma.done [#allocation3], 16
    $region17: #{temporal_gnn_forward.1} parent=1 // pred_fallthru
      _
    %26 = sfence
    %v27 = vld [vmem:[%s2] sm:$0xff]
    %v28 = vld [vmem:[%s2 + $0x8] sm:$0xff]
    %v29 = vld [vmem:[%s2 + $0x10] sm:$0xf]
    %v30 = vld [vmem:[%s2 + $0x18] sm:$0x1]
    %v31 = vld [vmem:[%s2 + $0x20] sm:$0xff]
    %v32 = vld [vmem:[%s2 + $0x28] sm:$0xff]
    %v33 = vld [vmem:[%s2 + $0x30] sm:$0xff]
    %v34 = vld [vmem:[%s2 + $0x38] sm:$0xff]
    %v35 = vld [vmem:[%s2 + $0x40] sm:$0xff]
    %v36 = vld [vmem:[%s2 + $0x48] sm:$0xff]
    %v37 = vld [vmem:[%s2 + $0x50] sm:$0xff]
    %v38 = vld [vmem:[%s2 + $0x58] sm:$0xff]
    %v39 = vld [vmem:[%s2 + $0x60] sm:$0x1]
    %v40 = vld [vmem:[%s2 + $0x68] sm:$0xff]
    %v41 = vld [vmem:[%s2 + $0x70] sm:$0xff]
    %v42 = vld [vmem:[%s2 + $0x78] sm:$0xff]
    %v43 = vld [vmem:[%s2 + $0x80] sm:$0xff]
    %v44 = vld [vmem:[%s2 + $0x88] sm:$0x1]
    %v45 = vld [vmem:[%s0] sm:$0xff]
    %v46 = vld [vmem:[%s0 + $0x8] sm:$0xff]
    %v47 = vld [vmem:[%s0 + $0x10] sm:$0xff]
    %v48 = vld [vmem:[%s0 + $0x18] sm:$0xff]
    %v49 = vld [vmem:[%s0 + $0x20] sm:$0xff]
    %v50 = vld [vmem:[%s0 + $0x28] sm:$0xff]
    %v51 = vld [vmem:[%s0 + $0x30] sm:$0xff]
    %v52 = vld [vmem:[%s0 + $0x38] sm:$0xff]
    %v53 = vld [vmem:[%s0 + $0x40] sm:$0xff]
    %v54 = vld [vmem:[%s0 + $0x48] sm:$0xff]
    %v55 = vld [vmem:[%s0 + $0x50] sm:$0xff]
    %v56 = vld [vmem:[%s0 + $0x58] sm:$0xff]
    %v57 = vld [vmem:[%s0 + $0x60] sm:$0xff]
    %v58 = vld [vmem:[%s0 + $0x68] sm:$0xff]
    %v59 = vld [vmem:[%s0 + $0x70] sm:$0xff]
    %v60 = vld [vmem:[%s0 + $0x78] sm:$0xff]
    %vm61 = vcmask 31744
    %v63 = vsel %vm61, %v45, 0
    %v66 = vsel %vm61, %v46, 0
    %v69 = vsel %vm61, %v47, 0
    %v72 = vsel %vm61, %v48, 0
    %v75 = vsel %vm61, %v49, 0
    %v78 = vsel %vm61, %v50, 0
    %v81 = vsel %vm61, %v51, 0
    %v84 = vsel %vm61, %v52, 0
    %v87 = vsel %vm61, %v53, 0
    %v90 = vsel %vm61, %v54, 0
    %v93 = vsel %vm61, %v55, 0
    %v96 = vsel %vm61, %v56, 0
    %v99 = vsel %vm61, %v57, 0
    %v102 = vsel %vm61, %v58, 0
    %v105 = vsel %vm61, %v59, 0
    %v108 = vsel %vm61, %v60, 0
    %vm110 = vcmask 1043456
    %v112 = vsel %vm110, %v29, 0
    %114 = vmatprep.subr.mxu0 0.0
    %115 = vmatpush1.msra.mxu0 0.0
    %116 = vmatprep.subr.mxu0 0.0
    %117 = vmatpush1.msra.mxu0 0.0
    %118 = vmatprep.subr.mxu0 0.0
    %119 = vmatpush1.msra.mxu0 0.0
    %120 = vmatprep.subr.mxu0 0.0
    %121 = vmatpush1.msra.mxu0 0.0
    %122 = vmatprep.subr.mxu0 0.0
    %123 = vmatpush1.msra.mxu0 0.0
    %124 = vmatprep.subr.mxu0 0.0
    %125 = vmatpush1.msra.mxu0 0.0
    %126 = vmatprep.subr.mxu0 0.0
    %127 = vmatpush1.msra.mxu0 0.0
    %128 = vmatprep.subr.mxu0 0.0
    %129 = vmatpush1.msra.mxu0 0.0
    %130 = vmatprep.subr.mxu0 0.0
    %131 = vmatpush1.msra.mxu0 0.0
    %132 = vmatprep.subr.mxu0 0.0
    %133 = vmatpush1.msra.mxu0 0.0
    %134 = vmatprep.subr.mxu0 0.0
    %135 = vmatpush1.msra.mxu0 0.0
    %136 = vmatprep.subr.mxu0 0.0
    %137 = vmatpush1.msra.mxu0 0.0
    %138 = vmatprep.subr.mxu0 0.0
    %139 = vmatpush1.msra.mxu0 0.0
    %140 = vmatprep.subr.mxu0 0.0
    %141 = vmatpush1.msra.mxu0 0.0
    %142 = vmatprep.subr.mxu0 0.0
    %143 = vmatpush1.msra.mxu0 0.0
    %144 = vmatprep.subr.mxu0 0.0
    %145 = vmatpush1.msra.mxu0 %v112
    %146 = vmatprep.subr.mxu0 0.0
    %147 = vmatpush2.msra.mxu0 0.0
    %148 = vmatprep.subr.mxu0 0.0
    %149 = vmatpush2.msra.mxu0 0.0
    %150 = vmatprep.subr.mxu0 0.0
    %151 = vmatpush2.msra.mxu0 0.0
    %152 = vmatprep.subr.mxu0 0.0
    %153 = vmatpush2.msra.mxu0 0.0
    %154 = vmatprep.subr.mxu0 0.0
    %155 = vmatpush2.msra.mxu0 0.0
    %156 = vmatprep.subr.mxu0 0.0
    %157 = vmatpush2.msra.mxu0 0.0
    %158 = vmatprep.subr.mxu0 0.0
    %159 = vmatpush2.msra.mxu0 0.0
    %160 = vmatprep.subr.mxu0 0.0
    %161 = vmatpush2.msra.mxu0 0.0
    %162 = vmatprep.subr.mxu0 0.0
    %163 = vmatpush2.msra.mxu0 0.0
    %164 = vmatprep.subr.mxu0 0.0
    %165 = vmatpush2.msra.mxu0 0.0
    %166 = vmatprep.subr.mxu0 0.0
    %167 = vmatpush2.msra.mxu0 0.0
    %168 = vmatprep.subr.mxu0 0.0
    %169 = vmatpush2.msra.mxu0 0.0
    %170 = vmatprep.subr.mxu0 0.0
    %171 = vmatpush2.msra.mxu0 0.0
    %172 = vmatprep.subr.mxu0 0.0
    %173 = vmatpush2.msra.mxu0 0.0
    %174 = vmatprep.subr.mxu0 0.0
    %175 = vmatpush2.msra.mxu0 0.0
    %176 = vmatprep.subr.mxu0 0.0
    %177 = vmatpush2.msra.mxu0 0.0
    %178 = vmatprep.mubr.f32.mxu0 0.0
    %179 = vmatmul.mubr.f32.gmra.mxu0 %v63
    %v180 = vpop.f32.mrf.mxu0
    %v181 = vadd.f32 0.0, %v180
    %v182 = vpop.f32.mrf.mxu0
    %183 = vmatprep.mubr.f32.mxu0 0.0
    %184 = vmatmul.mubr.f32.gmra.mxu0 %v66
    %v185 = vpop.f32.mrf.mxu0
    %v186 = vadd.f32 0.0, %v185
    %v187 = vpop.f32.mrf.mxu0
    %188 = vmatprep.mubr.f32.mxu0 0.0
    %189 = vmatmul.mubr.f32.gmra.mxu0 %v69
    %v190 = vpop.f32.mrf.mxu0
    %v191 = vadd.f32 0.0, %v190
    %v192 = vpop.f32.mrf.mxu0
    %193 = vmatprep.mubr.f32.mxu0 0.0
    %194 = vmatmul.mubr.f32.gmra.mxu0 %v72
    %v195 = vpop.f32.mrf.mxu0
    %v196 = vadd.f32 0.0, %v195
    %v197 = vpop.f32.mrf.mxu0
    %198 = vmatprep.mubr.f32.mxu0 0.0
    %199 = vmatmul.mubr.f32.gmra.mxu0 %v75
    %v200 = vpop.f32.mrf.mxu0
    %v201 = vadd.f32 0.0, %v200
    %v202 = vpop.f32.mrf.mxu0
    %203 = vmatprep.mubr.f32.mxu0 0.0
    %204 = vmatmul.mubr.f32.gmra.mxu0 %v78
    %v205 = vpop.f32.mrf.mxu0
    %v206 = vadd.f32 0.0, %v205
    %v207 = vpop.f32.mrf.mxu0
    %208 = vmatprep.mubr.f32.mxu0 0.0
    %209 = vmatmul.mubr.f32.gmra.mxu0 %v81
    %v210 = vpop.f32.mrf.mxu0
    %v211 = vadd.f32 0.0, %v210
    %v212 = vpop.f32.mrf.mxu0
    %213 = vmatprep.mubr.f32.mxu0 0.0
    %214 = vmatmul.mubr.f32.gmra.mxu0 %v84
    %v215 = vpop.f32.mrf.mxu0
    %v216 = vadd.f32 0.0, %v215
    %v217 = vpop.f32.mrf.mxu0
    %218 = vmatprep.mubr.f32.mxu0 0.0
    %219 = vmatmul.mubr.f32.gmra.mxu0 %v87
    %v220 = vpop.f32.mrf.mxu0
    %v221 = vadd.f32 0.0, %v220
    %v222 = vpop.f32.mrf.mxu0
    %223 = vmatprep.mubr.f32.mxu0 0.0
    %224 = vmatmul.mubr.f32.gmra.mxu0 %v90
    %v225 = vpop.f32.mrf.mxu0
    %v226 = vadd.f32 0.0, %v225
    %v227 = vpop.f32.mrf.mxu0
    %228 = vmatprep.mubr.f32.mxu0 0.0
    %229 = vmatmul.mubr.f32.gmra.mxu0 %v93
    %v230 = vpop.f32.mrf.mxu0
    %v231 = vadd.f32 0.0, %v230
    %v232 = vpop.f32.mrf.mxu0
    %233 = vmatprep.mubr.f32.mxu0 0.0
    %234 = vmatmul.mubr.f32.gmra.mxu0 %v96
    %v235 = vpop.f32.mrf.mxu0
    %v236 = vadd.f32 0.0, %v235
    %v237 = vpop.f32.mrf.mxu0
    %238 = vmatprep.mubr.f32.mxu0 0.0
    %239 = vmatmul.mubr.f32.gmra.mxu0 %v99
    %v240 = vpop.f32.mrf.mxu0
    %v241 = vadd.f32 0.0, %v240
    %v242 = vpop.f32.mrf.mxu0
    %243 = vmatprep.mubr.f32.mxu0 0.0
    %244 = vmatmul.mubr.f32.gmra.mxu0 %v102
    %v245 = vpop.f32.mrf.mxu0
    %v246 = vadd.f32 0.0, %v245
    %v247 = vpop.f32.mrf.mxu0
    %248 = vmatprep.mubr.f32.mxu0 0.0
    %249 = vmatmul.mubr.f32.gmra.mxu0 %v105
    %v250 = vpop.f32.mrf.mxu0
    %v251 = vadd.f32 0.0, %v250
    %v252 = vpop.f32.mrf.mxu0
    %253 = vmatprep.mubr.f32.mxu0 0.0
    %254 = vmatmul.mubr.f32.gmra.mxu0 %v108
    %v255 = vpop.f32.mrf.mxu0
    %v256 = vadd.f32 0.0, %v255
    %v257 = vpop.f32.mrf.mxu0
    %258 = vdwg.mxu0
    %vm259 = vcmask 130048
    %v261 = vsel %vm259, %v27, 0
    %v264 = vsel %vm259, %v28, 0
    %266 = vmatprep.subr.mxu0 0.0
    %267 = vmatpush1.msra.mxu0 0.0
    %268 = vmatprep.subr.mxu0 0.0
    %269 = vmatpush1.msra.mxu0 0.0
    %270 = vmatprep.subr.mxu0 0.0
    %271 = vmatpush1.msra.mxu0 0.0
    %272 = vmatprep.subr.mxu0 0.0
    %273 = vmatpush1.msra.mxu0 0.0
    %274 = vmatprep.subr.mxu0 0.0
    %275 = vmatpush1.msra.mxu0 0.0
    %276 = vmatprep.subr.mxu0 0.0
    %277 = vmatpush1.msra.mxu0 0.0
    %278 = vmatprep.subr.mxu0 0.0
    %279 = vmatpush1.msra.mxu0 0.0
    %280 = vmatprep.subr.mxu0 0.0
    %281 = vmatpush1.msra.mxu0 0.0
    %282 = vmatprep.subr.mxu0 0.0
    %283 = vmatpush1.msra.mxu0 0.0
    %284 = vmatprep.subr.mxu0 0.0
    %285 = vmatpush1.msra.mxu0 0.0
    %286 = vmatprep.subr.mxu0 0.0
    %287 = vmatpush1.msra.mxu0 0.0
    %288 = vmatprep.subr.mxu0 0.0
    %289 = vmatpush1.msra.mxu0 0.0
    %290 = vmatprep.subr.mxu0 0.0
    %291 = vmatpush1.msra.mxu0 0.0
    %292 = vmatprep.subr.mxu0 0.0
    %293 = vmatpush1.msra.mxu0 0.0
    %294 = vmatprep.subr.mxu0 0.0
    %295 = vmatpush1.msra.mxu0 %v186
    %296 = vmatprep.subr.mxu0 0.0
    %297 = vmatpush1.msra.mxu0 %v181
    %298 = vmatprep.subr.mxu0 0.0
    %299 = vmatpush2.msra.mxu0 0.0
    %300 = vmatprep.subr.mxu0 0.0
    %301 = vmatpush2.msra.mxu0 0.0
    %302 = vmatprep.subr.mxu0 0.0
    %303 = vmatpush2.msra.mxu0 0.0
    %304 = vmatprep.subr.mxu0 0.0
    %305 = vmatpush2.msra.mxu0 0.0
    %306 = vmatprep.subr.mxu0 0.0
    %307 = vmatpush2.msra.mxu0 0.0
    %308 = vmatprep.subr.mxu0 0.0
    %309 = vmatpush2.msra.mxu0 0.0
    %310 = vmatprep.subr.mxu0 0.0
    %311 = vmatpush2.msra.mxu0 0.0
    %312 = vmatprep.subr.mxu0 0.0
    %313 = vmatpush2.msra.mxu0 0.0
    %314 = vmatprep.subr.mxu0 0.0
    %315 = vmatpush2.msra.mxu0 0.0
    %316 = vmatprep.subr.mxu0 0.0
    %317 = vmatpush2.msra.mxu0 0.0
    %318 = vmatprep.subr.mxu0 0.0
    %319 = vmatpush2.msra.mxu0 0.0
    %320 = vmatprep.subr.mxu0 0.0
    %321 = vmatpush2.msra.mxu0 0.0
    %322 = vmatprep.subr.mxu0 0.0
    %323 = vmatpush2.msra.mxu0 0.0
    %324 = vmatprep.subr.mxu0 0.0
    %325 = vmatpush2.msra.mxu0 0.0
    %326 = vmatprep.subr.mxu0 0.0
    %327 = vmatpush2.msra.mxu0 0.0
    %328 = vmatprep.subr.mxu0 0.0
    %329 = vmatpush2.msra.mxu0 0.0
    %330 = vmatprep.mubr.f32.mxu0 0.0
    %331 = vmatmul.mubr.f32.gmra.mxu0 %v261
    %v332 = vpop.f32.mrf.mxu0
    %v333 = vadd.f32 0.0, %v332
    %v334 = vpop.f32.mrf.mxu0
    %335 = vmatprep.mubr.f32.mxu0 0.0
    %336 = vmatmul.mubr.f32.gmra.mxu0 %v264
    %v337 = vpop.f32.mrf.mxu0
    %v338 = vadd.f32 0.0, %v337
    %v339 = vpop.f32.mrf.mxu0
    %340 = vdwg.mxu0
    %341 = vmatprep.subr.mxu0 0.0
    %342 = vmatpush1.msra.mxu0 0.0
    %343 = vmatprep.subr.mxu0 0.0
    %344 = vmatpush1.msra.mxu0 0.0
    %345 = vmatprep.subr.mxu0 0.0
    %346 = vmatpush1.msra.mxu0 0.0
    %347 = vmatprep.subr.mxu0 0.0
    %348 = vmatpush1.msra.mxu0 0.0
    %349 = vmatprep.subr.mxu0 0.0
    %350 = vmatpush1.msra.mxu0 0.0
    %351 = vmatprep.subr.mxu0 0.0
    %352 = vmatpush1.msra.mxu0 0.0
    %353 = vmatprep.subr.mxu0 0.0
    %354 = vmatpush1.msra.mxu0 0.0
    %355 = vmatprep.subr.mxu0 0.0
    %356 = vmatpush1.msra.mxu0 0.0
    %357 = vmatprep.subr.mxu0 0.0
    %358 = vmatpush1.msra.mxu0 0.0
    %359 = vmatprep.subr.mxu0 0.0
    %360 = vmatpush1.msra.mxu0 0.0
    %361 = vmatprep.subr.mxu0 0.0
    %362 = vmatpush1.msra.mxu0 0.0
    %363 = vmatprep.subr.mxu0 0.0
    %364 = vmatpush1.msra.mxu0 0.0
    %365 = vmatprep.subr.mxu0 0.0
    %366 = vmatpush1.msra.mxu0 0.0
    %367 = vmatprep.subr.mxu0 0.0
    %368 = vmatpush1.msra.mxu0 0.0
    %369 = vmatprep.subr.mxu0 0.0
    %370 = vmatpush1.msra.mxu0 %v196
    %371 = vmatprep.subr.mxu0 0.0
    %372 = vmatpush1.msra.mxu0 %v191
    %373 = vmatprep.subr.mxu0 0.0
    %374 = vmatpush2.msra.mxu0 0.0
    %375 = vmatprep.subr.mxu0 0.0
    %376 = vmatpush2.msra.mxu0 0.0
    %377 = vmatprep.subr.mxu0 0.0
    %378 = vmatpush2.msra.mxu0 0.0
    %379 = vmatprep.subr.mxu0 0.0
    %380 = vmatpush2.msra.mxu0 0.0
    %381 = vmatprep.subr.mxu0 0.0
    %382 = vmatpush2.msra.mxu0 0.0
    %383 = vmatprep.subr.mxu0 0.0
    %384 = vmatpush2.msra.mxu0 0.0
    %385 = vmatprep.subr.mxu0 0.0
    %386 = vmatpush2.msra.mxu0 0.0
    %387 = vmatprep.subr.mxu0 0.0
    %388 = vmatpush2.msra.mxu0 0.0
    %389 = vmatprep.subr.mxu0 0.0
    %390 = vmatpush2.msra.mxu0 0.0
    %391 = vmatprep.subr.mxu0 0.0
    %392 = vmatpush2.msra.mxu0 0.0
    %393 = vmatprep.subr.mxu0 0.0
    %394 = vmatpush2.msra.mxu0 0.0
    %395 = vmatprep.subr.mxu0 0.0
    %396 = vmatpush2.msra.mxu0 0.0
    %397 = vmatprep.subr.mxu0 0.0
    %398 = vmatpush2.msra.mxu0 0.0
    %399 = vmatprep.subr.mxu0 0.0
    %400 = vmatpush2.msra.mxu0 0.0
    %401 = vmatprep.subr.mxu0 0.0
    %402 = vmatpush2.msra.mxu0 0.0
    %403 = vmatprep.subr.mxu0 0.0
    %404 = vmatpush2.msra.mxu0 0.0
    %405 = vmatprep.mubr.f32.mxu0 0.0
    %406 = vmatmul.mubr.f32.gmra.mxu0 %v261
    %v407 = vpop.f32.mrf.mxu0
    %v408 = vadd.f32 0.0, %v407
    %v409 = vpop.f32.mrf.mxu0
    %410 = vmatprep.mubr.f32.mxu0 0.0
    %411 = vmatmul.mubr.f32.gmra.mxu0 %v264
    %v412 = vpop.f32.mrf.mxu0
    %v413 = vadd.f32 0.0, %v412
    %v414 = vpop.f32.mrf.mxu0
    %415 = vdwg.mxu0
    %416 = vmatprep.subr.mxu0 0.0
    %417 = vmatpush1.msra.mxu0 0.0
    %418 = vmatprep.subr.mxu0 0.0
    %419 = vmatpush1.msra.mxu0 0.0
    %420 = vmatprep.subr.mxu0 0.0
    %421 = vmatpush1.msra.mxu0 0.0
    %422 = vmatprep.subr.mxu0 0.0
    %423 = vmatpush1.msra.mxu0 0.0
    %424 = vmatprep.subr.mxu0 0.0
    %425 = vmatpush1.msra.mxu0 0.0
    %426 = vmatprep.subr.mxu0 0.0
    %427 = vmatpush1.msra.mxu0 0.0
    %428 = vmatprep.subr.mxu0 0.0
    %429 = vmatpush1.msra.mxu0 0.0
    %430 = vmatprep.subr.mxu0 0.0
    %431 = vmatpush1.msra.mxu0 0.0
    %432 = vmatprep.subr.mxu0 0.0
    %433 = vmatpush1.msra.mxu0 0.0
    %434 = vmatprep.subr.mxu0 0.0
    %435 = vmatpush1.msra.mxu0 0.0
    %436 = vmatprep.subr.mxu0 0.0
    %437 = vmatpush1.msra.mxu0 0.0
    %438 = vmatprep.subr.mxu0 0.0
    %439 = vmatpush1.msra.mxu0 0.0
    %440 = vmatprep.subr.mxu0 0.0
    %441 = vmatpush1.msra.mxu0 0.0
    %442 = vmatprep.subr.mxu0 0.0
    %443 = vmatpush1.msra.mxu0 0.0
    %444 = vmatprep.subr.mxu0 0.0
    %445 = vmatpush1.msra.mxu0 %v206
    %446 = vmatprep.subr.mxu0 0.0
    %447 = vmatpush1.msra.mxu0 %v201
    %448 = vmatprep.subr.mxu0 0.0
    %449 = vmatpush2.msra.mxu0 0.0
    %450 = vmatprep.subr.mxu0 0.0
    %451 = vmatpush2.msra.mxu0 0.0
    %452 = vmatprep.subr.mxu0 0.0
    %453 = vmatpush2.msra.mxu0 0.0
    %454 = vmatprep.subr.mxu0 0.0
    %455 = vmatpush2.msra.mxu0 0.0
    %456 = vmatprep.subr.mxu0 0.0
    %457 = vmatpush2.msra.mxu0 0.0
    %458 = vmatprep.subr.mxu0 0.0
    %459 = vmatpush2.msra.mxu0 0.0
    %460 = vmatprep.subr.mxu0 0.0
    %461 = vmatpush2.msra.mxu0 0.0
    %462 = vmatprep.subr.mxu0 0.0
    %463 = vmatpush2.msra.mxu0 0.0
    %464 = vmatprep.subr.mxu0 0.0
    %465 = vmatpush2.msra.mxu0 0.0
    %466 = vmatprep.subr.mxu0 0.0
    %467 = vmatpush2.msra.mxu0 0.0
    %468 = vmatprep.subr.mxu0 0.0
    %469 = vmatpush2.msra.mxu0 0.0
    %470 = vmatprep.subr.mxu0 0.0
    %471 = vmatpush2.msra.mxu0 0.0
    %472 = vmatprep.subr.mxu0 0.0
    %473 = vmatpush2.msra.mxu0 0.0
    %474 = vmatprep.subr.mxu0 0.0
    %475 = vmatpush2.msra.mxu0 0.0
    %476 = vmatprep.subr.mxu0 0.0
    %477 = vmatpush2.msra.mxu0 0.0
    %478 = vmatprep.subr.mxu0 0.0
    %479 = vmatpush2.msra.mxu0 0.0
    %480 = vmatprep.mubr.f32.mxu0 0.0
    %481 = vmatmul.mubr.f32.gmra.mxu0 %v261
    %v482 = vpop.f32.mrf.mxu0
    %v483 = vadd.f32 0.0, %v482
    %v484 = vpop.f32.mrf.mxu0
    %485 = vmatprep.mubr.f32.mxu0 0.0
    %486 = vmatmul.mubr.f32.gmra.mxu0 %v264
    %v487 = vpop.f32.mrf.mxu0
    %v488 = vadd.f32 0.0, %v487
    %v489 = vpop.f32.mrf.mxu0
    %490 = vdwg.mxu0
    %491 = vmatprep.subr.mxu0 0.0
    %492 = vmatpush1.msra.mxu0 0.0
    %493 = vmatprep.subr.mxu0 0.0
    %494 = vmatpush1.msra.mxu0 0.0
    %495 = vmatprep.subr.mxu0 0.0
    %496 = vmatpush1.msra.mxu0 0.0
    %497 = vmatprep.subr.mxu0 0.0
    %498 = vmatpush1.msra.mxu0 0.0
    %499 = vmatprep.subr.mxu0 0.0
    %500 = vmatpush1.msra.mxu0 0.0
    %501 = vmatprep.subr.mxu0 0.0
    %502 = vmatpush1.msra.mxu0 0.0
    %503 = vmatprep.subr.mxu0 0.0
    %504 = vmatpush1.msra.mxu0 0.0
    %505 = vmatprep.subr.mxu0 0.0
    %506 = vmatpush1.msra.mxu0 0.0
    %507 = vmatprep.subr.mxu0 0.0
    %508 = vmatpush1.msra.mxu0 0.0
    %509 = vmatprep.subr.mxu0 0.0
    %510 = vmatpush1.msra.mxu0 0.0
    %511 = vmatprep.subr.mxu0 0.0
    %512 = vmatpush1.msra.mxu0 0.0
    %513 = vmatprep.subr.mxu0 0.0
    %514 = vmatpush1.msra.mxu0 0.0
    %515 = vmatprep.subr.mxu0 0.0
    %516 = vmatpush1.msra.mxu0 0.0
    %517 = vmatprep.subr.mxu0 0.0
    %518 = vmatpush1.msra.mxu0 0.0
    %519 = vmatprep.subr.mxu0 0.0
    %520 = vmatpush1.msra.mxu0 %v216
    %521 = vmatprep.subr.mxu0 0.0
    %522 = vmatpush1.msra.mxu0 %v211
    %523 = vmatprep.subr.mxu0 0.0
    %524 = vmatpush2.msra.mxu0 0.0
    %525 = vmatprep.subr.mxu0 0.0
    %526 = vmatpush2.msra.mxu0 0.0
    %527 = vmatprep.subr.mxu0 0.0
    %528 = vmatpush2.msra.mxu0 0.0
    %529 = vmatprep.subr.mxu0 0.0
    %530 = vmatpush2.msra.mxu0 0.0
    %531 = vmatprep.subr.mxu0 0.0
    %532 = vmatpush2.msra.mxu0 0.0
    %533 = vmatprep.subr.mxu0 0.0
    %534 = vmatpush2.msra.mxu0 0.0
    %535 = vmatprep.subr.mxu0 0.0
    %536 = vmatpush2.msra.mxu0 0.0
    %537 = vmatprep.subr.mxu0 0.0
    %538 = vmatpush2.msra.mxu0 0.0
    %539 = vmatprep.subr.mxu0 0.0
    %540 = vmatpush2.msra.mxu0 0.0
    %541 = vmatprep.subr.mxu0 0.0
    %542 = vmatpush2.msra.mxu0 0.0
    %543 = vmatprep.subr.mxu0 0.0
    %544 = vmatpush2.msra.mxu0 0.0
    %545 = vmatprep.subr.mxu0 0.0
    %546 = vmatpush2.msra.mxu0 0.0
    %547 = vmatprep.subr.mxu0 0.0
    %548 = vmatpush2.msra.mxu0 0.0
    %549 = vmatprep.subr.mxu0 0.0
    %550 = vmatpush2.msra.mxu0 0.0
    %551 = vmatprep.subr.mxu0 0.0
    %552 = vmatpush2.msra.mxu0 0.0
    %553 = vmatprep.subr.mxu0 0.0
    %554 = vmatpush2.msra.mxu0 0.0
    %555 = vmatprep.mubr.f32.mxu0 0.0
    %556 = vmatmul.mubr.f32.gmra.mxu0 %v261
    %v557 = vpop.f32.mrf.mxu0
    %v558 = vadd.f32 0.0, %v557
    %v559 = vpop.f32.mrf.mxu0
    %560 = vmatprep.mubr.f32.mxu0 0.0
    %561 = vmatmul.mubr.f32.gmra.mxu0 %v264
    %v562 = vpop.f32.mrf.mxu0
    %v563 = vadd.f32 0.0, %v562
    %v564 = vpop.f32.mrf.mxu0
    %565 = vdwg.mxu0
    %566 = vmatprep.subr.mxu0 0.0
    %567 = vmatpush1.msra.mxu0 0.0
    %568 = vmatprep.subr.mxu0 0.0
    %569 = vmatpush1.msra.mxu0 0.0
    %570 = vmatprep.subr.mxu0 0.0
    %571 = vmatpush1.msra.mxu0 0.0
    %572 = vmatprep.subr.mxu0 0.0
    %573 = vmatpush1.msra.mxu0 0.0
    %574 = vmatprep.subr.mxu0 0.0
    %575 = vmatpush1.msra.mxu0 0.0
    %576 = vmatprep.subr.mxu0 0.0
    %577 = vmatpush1.msra.mxu0 0.0
    %578 = vmatprep.subr.mxu0 0.0
    %579 = vmatpush1.msra.mxu0 0.0
    %580 = vmatprep.subr.mxu0 0.0
    %581 = vmatpush1.msra.mxu0 0.0
    %582 = vmatprep.subr.mxu0 0.0
    %583 = vmatpush1.msra.mxu0 0.0
    %584 = vmatprep.subr.mxu0 0.0
    %585 = vmatpush1.msra.mxu0 0.0
    %586 = vmatprep.subr.mxu0 0.0
    %587 = vmatpush1.msra.mxu0 0.0
    %588 = vmatprep.subr.mxu0 0.0
    %589 = vmatpush1.msra.mxu0 0.0
    %590 = vmatprep.subr.mxu0 0.0
    %591 = vmatpush1.msra.mxu0 0.0
    %592 = vmatprep.subr.mxu0 0.0
    %593 = vmatpush1.msra.mxu0 0.0
    %594 = vmatprep.subr.mxu0 0.0
    %595 = vmatpush1.msra.mxu0 %v226
    %596 = vmatprep.subr.mxu0 0.0
    %597 = vmatpush1.msra.mxu0 %v221
    %598 = vmatprep.subr.mxu0 0.0
    %599 = vmatpush2.msra.mxu0 0.0
    %600 = vmatprep.subr.mxu0 0.0
    %601 = vmatpush2.msra.mxu0 0.0
    %602 = vmatprep.subr.mxu0 0.0
    %603 = vmatpush2.msra.mxu0 0.0
    %604 = vmatprep.subr.mxu0 0.0
    %605 = vmatpush2.msra.mxu0 0.0
    %606 = vmatprep.subr.mxu0 0.0
    %607 = vmatpush2.msra.mxu0 0.0
    %608 = vmatprep.subr.mxu0 0.0
    %609 = vmatpush2.msra.mxu0 0.0
    %610 = vmatprep.subr.mxu0 0.0
    %611 = vmatpush2.msra.mxu0 0.0
    %612 = vmatprep.subr.mxu0 0.0
    %613 = vmatpush2.msra.mxu0 0.0
    %614 = vmatprep.subr.mxu0 0.0
    %615 = vmatpush2.msra.mxu0 0.0
    %616 = vmatprep.subr.mxu0 0.0
    %617 = vmatpush2.msra.mxu0 0.0
    %618 = vmatprep.subr.mxu0 0.0
    %619 = vmatpush2.msra.mxu0 0.0
    %620 = vmatprep.subr.mxu0 0.0
    %621 = vmatpush2.msra.mxu0 0.0
    %622 = vmatprep.subr.mxu0 0.0
    %623 = vmatpush2.msra.mxu0 0.0
    %624 = vmatprep.subr.mxu0 0.0
    %625 = vmatpush2.msra.mxu0 0.0
    %626 = vmatprep.subr.mxu0 0.0
    %627 = vmatpush2.msra.mxu0 0.0
    %628 = vmatprep.subr.mxu0 0.0
    %629 = vmatpush2.msra.mxu0 0.0
    %630 = vmatprep.mubr.f32.mxu0 0.0
    %631 = vmatmul.mubr.f32.gmra.mxu0 %v261
    %v632 = vpop.f32.mrf.mxu0
    %v633 = vadd.f32 0.0, %v632
    %v634 = vpop.f32.mrf.mxu0
    %635 = vmatprep.mubr.f32.mxu0 0.0
    %636 = vmatmul.mubr.f32.gmra.mxu0 %v264
    %v637 = vpop.f32.mrf.mxu0
    %v638 = vadd.f32 0.0, %v637
    %v639 = vpop.f32.mrf.mxu0
    %640 = vdwg.mxu0
    %641 = vmatprep.subr.mxu0 0.0
    %642 = vmatpush1.msra.mxu0 0.0
    %643 = vmatprep.subr.mxu0 0.0
    %644 = vmatpush1.msra.mxu0 0.0
    %645 = vmatprep.subr.mxu0 0.0
    %646 = vmatpush1.msra.mxu0 0.0
    %647 = vmatprep.subr.mxu0 0.0
    %648 = vmatpush1.msra.mxu0 0.0
    %649 = vmatprep.subr.mxu0 0.0
    %650 = vmatpush1.msra.mxu0 0.0
    %651 = vmatprep.subr.mxu0 0.0
    %652 = vmatpush1.msra.mxu0 0.0
    %653 = vmatprep.subr.mxu0 0.0
    %654 = vmatpush1.msra.mxu0 0.0
    %655 = vmatprep.subr.mxu0 0.0
    %656 = vmatpush1.msra.mxu0 0.0
    %657 = vmatprep.subr.mxu0 0.0
    %658 = vmatpush1.msra.mxu0 0.0
    %659 = vmatprep.subr.mxu0 0.0
    %660 = vmatpush1.msra.mxu0 0.0
    %661 = vmatprep.subr.mxu0 0.0
    %662 = vmatpush1.msra.mxu0 0.0
    %663 = vmatprep.subr.mxu0 0.0
    %664 = vmatpush1.msra.mxu0 0.0
    %665 = vmatprep.subr.mxu0 0.0
    %666 = vmatpush1.msra.mxu0 0.0
    %667 = vmatprep.subr.mxu0 0.0
    %668 = vmatpush1.msra.mxu0 0.0
    %669 = vmatprep.subr.mxu0 0.0
    %670 = vmatpush1.msra.mxu0 %v236
    %671 = vmatprep.subr.mxu0 0.0
    %672 = vmatpush1.msra.mxu0 %v231
    %673 = vmatprep.subr.mxu0 0.0
    %674 = vmatpush2.msra.mxu0 0.0
    %675 = vmatprep.subr.mxu0 0.0
    %676 = vmatpush2.msra.mxu0 0.0
    %677 = vmatprep.subr.mxu0 0.0
    %678 = vmatpush2.msra.mxu0 0.0
    %679 = vmatprep.subr.mxu0 0.0
    %680 = vmatpush2.msra.mxu0 0.0
    %681 = vmatprep.subr.mxu0 0.0
    %682 = vmatpush2.msra.mxu0 0.0
    %683 = vmatprep.subr.mxu0 0.0
    %684 = vmatpush2.msra.mxu0 0.0
    %685 = vmatprep.subr.mxu0 0.0
    %686 = vmatpush2.msra.mxu0 0.0
    %687 = vmatprep.subr.mxu0 0.0
    %688 = vmatpush2.msra.mxu0 0.0
    %689 = vmatprep.subr.mxu0 0.0
    %690 = vmatpush2.msra.mxu0 0.0
    %691 = vmatprep.subr.mxu0 0.0
    %692 = vmatpush2.msra.mxu0 0.0
    %693 = vmatprep.subr.mxu0 0.0
    %694 = vmatpush2.msra.mxu0 0.0
    %695 = vmatprep.subr.mxu0 0.0
    %696 = vmatpush2.msra.mxu0 0.0
    %697 = vmatprep.subr.mxu0 0.0
    %698 = vmatpush2.msra.mxu0 0.0
    %699 = vmatprep.subr.mxu0 0.0
    %700 = vmatpush2.msra.mxu0 0.0
    %701 = vmatprep.subr.mxu0 0.0
    %702 = vmatpush2.msra.mxu0 0.0
    %703 = vmatprep.subr.mxu0 0.0
    %704 = vmatpush2.msra.mxu0 0.0
    %705 = vmatprep.mubr.f32.mxu0 0.0
    %706 = vmatmul.mubr.f32.gmra.mxu0 %v261
    %v707 = vpop.f32.mrf.mxu0
    %v708 = vadd.f32 0.0, %v707
    %v709 = vpop.f32.mrf.mxu0
    %710 = vmatprep.mubr.f32.mxu0 0.0
    %711 = vmatmul.mubr.f32.gmra.mxu0 %v264
    %v712 = vpop.f32.mrf.mxu0
    %v713 = vadd.f32 0.0, %v712
    %v714 = vpop.f32.mrf.mxu0
    %715 = vdwg.mxu0
    %716 = vmatprep.subr.mxu0 0.0
    %717 = vmatpush1.msra.mxu0 0.0
    %718 = vmatprep.subr.mxu0 0.0
    %719 = vmatpush1.msra.mxu0 0.0
    %720 = vmatprep.subr.mxu0 0.0
    %721 = vmatpush1.msra.mxu0 0.0
    %722 = vmatprep.subr.mxu0 0.0
    %723 = vmatpush1.msra.mxu0 0.0
    %724 = vmatprep.subr.mxu0 0.0
    %725 = vmatpush1.msra.mxu0 0.0
    %726 = vmatprep.subr.mxu0 0.0
    %727 = vmatpush1.msra.mxu0 0.0
    %728 = vmatprep.subr.mxu0 0.0
    %729 = vmatpush1.msra.mxu0 0.0
    %730 = vmatprep.subr.mxu0 0.0
    %731 = vmatpush1.msra.mxu0 0.0
    %732 = vmatprep.subr.mxu0 0.0
    %733 = vmatpush1.msra.mxu0 0.0
    %734 = vmatprep.subr.mxu0 0.0
    %735 = vmatpush1.msra.mxu0 0.0
    %736 = vmatprep.subr.mxu0 0.0
    %737 = vmatpush1.msra.mxu0 0.0
    %738 = vmatprep.subr.mxu0 0.0
    %739 = vmatpush1.msra.mxu0 0.0
    %740 = vmatprep.subr.mxu0 0.0
    %741 = vmatpush1.msra.mxu0 0.0
    %742 = vmatprep.subr.mxu0 0.0
    %743 = vmatpush1.msra.mxu0 0.0
    %744 = vmatprep.subr.mxu0 0.0
    %745 = vmatpush1.msra.mxu0 %v246
    %746 = vmatprep.subr.mxu0 0.0
    %747 = vmatpush1.msra.mxu0 %v241
    %748 = vmatprep.subr.mxu0 0.0
    %749 = vmatpush2.msra.mxu0 0.0
    %750 = vmatprep.subr.mxu0 0.0
    %751 = vmatpush2.msra.mxu0 0.0
    %752 = vmatprep.subr.mxu0 0.0
    %753 = vmatpush2.msra.mxu0 0.0
    %754 = vmatprep.subr.mxu0 0.0
    %755 = vmatpush2.msra.mxu0 0.0
    %756 = vmatprep.subr.mxu0 0.0
    %757 = vmatpush2.msra.mxu0 0.0
    %758 = vmatprep.subr.mxu0 0.0
    %759 = vmatpush2.msra.mxu0 0.0
    %760 = vmatprep.subr.mxu0 0.0
    %761 = vmatpush2.msra.mxu0 0.0
    %762 = vmatprep.subr.mxu0 0.0
    %763 = vmatpush2.msra.mxu0 0.0
    %764 = vmatprep.subr.mxu0 0.0
    %765 = vmatpush2.msra.mxu0 0.0
    %766 = vmatprep.subr.mxu0 0.0
    %767 = vmatpush2.msra.mxu0 0.0
    %768 = vmatprep.subr.mxu0 0.0
    %769 = vmatpush2.msra.mxu0 0.0
    %770 = vmatprep.subr.mxu0 0.0
    %771 = vmatpush2.msra.mxu0 0.0
    %772 = vmatprep.subr.mxu0 0.0
    %773 = vmatpush2.msra.mxu0 0.0
    %774 = vmatprep.subr.mxu0 0.0
    %775 = vmatpush2.msra.mxu0 0.0
    %776 = vmatprep.subr.mxu0 0.0
    %777 = vmatpush2.msra.mxu0 0.0
    %778 = vmatprep.subr.mxu0 0.0
    %779 = vmatpush2.msra.mxu0 0.0
    %780 = vmatprep.mubr.f32.mxu0 0.0
    %781 = vmatmul.mubr.f32.gmra.mxu0 %v261
    %v782 = vpop.f32.mrf.mxu0
    %v783 = vadd.f32 0.0, %v782
    %v784 = vpop.f32.mrf.mxu0
    %785 = vmatprep.mubr.f32.mxu0 0.0
    %786 = vmatmul.mubr.f32.gmra.mxu0 %v264
    %v787 = vpop.f32.mrf.mxu0
    %v788 = vadd.f32 0.0, %v787
    %v789 = vpop.f32.mrf.mxu0
    %790 = vdwg.mxu0
    %791 = vmatprep.subr.mxu0 0.0
    %792 = vmatpush1.msra.mxu0 0.0
    %793 = vmatprep.subr.mxu0 0.0
    %794 = vmatpush1.msra.mxu0 0.0
    %795 = vmatprep.subr.mxu0 0.0
    %796 = vmatpush1.msra.mxu0 0.0
    %797 = vmatprep.subr.mxu0 0.0
    %798 = vmatpush1.msra.mxu0 0.0
    %799 = vmatprep.subr.mxu0 0.0
    %800 = vmatpush1.msra.mxu0 0.0
    %801 = vmatprep.subr.mxu0 0.0
    %802 = vmatpush1.msra.mxu0 0.0
    %803 = vmatprep.subr.mxu0 0.0
    %804 = vmatpush1.msra.mxu0 0.0
    %805 = vmatprep.subr.mxu0 0.0
    %806 = vmatpush1.msra.mxu0 0.0
    %807 = vmatprep.subr.mxu0 0.0
    %808 = vmatpush1.msra.mxu0 0.0
    %809 = vmatprep.subr.mxu0 0.0
    %810 = vmatpush1.msra.mxu0 0.0
    %811 = vmatprep.subr.mxu0 0.0
    %812 = vmatpush1.msra.mxu0 0.0
    %813 = vmatprep.subr.mxu0 0.0
    %814 = vmatpush1.msra.mxu0 0.0
    %815 = vmatprep.subr.mxu0 0.0
    %816 = vmatpush1.msra.mxu0 0.0
    %817 = vmatprep.subr.mxu0 0.0
    %818 = vmatpush1.msra.mxu0 0.0
    %819 = vmatprep.subr.mxu0 0.0
    %820 = vmatpush1.msra.mxu0 %v256
    %821 = vmatprep.subr.mxu0 0.0
    %822 = vmatpush1.msra.mxu0 %v251
    %823 = vmatprep.subr.mxu0 0.0
    %824 = vmatpush2.msra.mxu0 0.0
    %825 = vmatprep.subr.mxu0 0.0
    %826 = vmatpush2.msra.mxu0 0.0
    %827 = vmatprep.subr.mxu0 0.0
    %828 = vmatpush2.msra.mxu0 0.0
    %829 = vmatprep.subr.mxu0 0.0
    %830 = vmatpush2.msra.mxu0 0.0
    %831 = vmatprep.subr.mxu0 0.0
    %832 = vmatpush2.msra.mxu0 0.0
    %833 = vmatprep.subr.mxu0 0.0
    %834 = vmatpush2.msra.mxu0 0.0
    %835 = vmatprep.subr.mxu0 0.0
    %836 = vmatpush2.msra.mxu0 0.0
    %837 = vmatprep.subr.mxu0 0.0
    %838 = vmatpush2.msra.mxu0 0.0
    %839 = vmatprep.subr.mxu0 0.0
    %840 = vmatpush2.msra.mxu0 0.0
    %841 = vmatprep.subr.mxu0 0.0
    %842 = vmatpush2.msra.mxu0 0.0
    %843 = vmatprep.subr.mxu0 0.0
    %844 = vmatpush2.msra.mxu0 0.0
    %845 = vmatprep.subr.mxu0 0.0
    %846 = vmatpush2.msra.mxu0 0.0
    %847 = vmatprep.subr.mxu0 0.0
    %848 = vmatpush2.msra.mxu0 0.0
    %849 = vmatprep.subr.mxu0 0.0
    %850 = vmatpush2.msra.mxu0 0.0
    %851 = vmatprep.subr.mxu0 0.0
    %852 = vmatpush2.msra.mxu0 0.0
    %853 = vmatprep.subr.mxu0 0.0
    %854 = vmatpush2.msra.mxu0 0.0
    %855 = vmatprep.mubr.f32.mxu0 0.0
    %856 = vmatmul.mubr.f32.gmra.mxu0 %v261
    %v857 = vpop.f32.mrf.mxu0
    %v858 = vadd.f32 0.0, %v857
    %v859 = vpop.f32.mrf.mxu0
    %860 = vmatprep.mubr.f32.mxu0 0.0
    %861 = vmatmul.mubr.f32.gmra.mxu0 %v264
    %v862 = vpop.f32.mrf.mxu0
    %v863 = vadd.f32 0.0, %v862
    %v864 = vpop.f32.mrf.mxu0
    %865 = vdwg.mxu0
    %v866 = vlaneseq
    %v867 = vshrl.u32 %v866, 7
    %v868 = vsub.s32 0, %v867
    %v869 = vrot.slane %v30, %v868
    %v870 = vadd.f32 %v333, %v869
    %v871 = vadd.f32 %v338, %v869
    %v872 = vadd.f32 %v408, %v869
    %v873 = vadd.f32 %v413, %v869
    %v874 = vadd.f32 %v483, %v869
    %v875 = vadd.f32 %v488, %v869
    %v876 = vadd.f32 %v558, %v869
    %v877 = vadd.f32 %v563, %v869
    %v878 = vadd.f32 %v633, %v869
    %v879 = vadd.f32 %v638, %v869
    %v880 = vadd.f32 %v708, %v869
    %v881 = vadd.f32 %v713, %v869
    %v882 = vadd.f32 %v783, %v869
    %v883 = vadd.f32 %v788, %v869
    %v884 = vadd.f32 %v858, %v869
    %v885 = vadd.f32 %v863, %v869
    %v886 = vlaneseq
    %v887 = vshrl.u32 %v886, 7
    %v888 = vsub.s32 0, %v887
    %v889 = vrot.slane %v39, %v888
    %vm890 = vcmask 523264
    %v892 = vsel %vm890, %v870, 0
    %v895 = vsel %vm890, %v871, 0
    %v898 = vsel %vm890, %v872, 0
    %v901 = vsel %vm890, %v873, 0
    %v904 = vsel %vm890, %v874, 0
    %v907 = vsel %vm890, %v875, 0
    %v910 = vsel %vm890, %v876, 0
    %v913 = vsel %vm890, %v877, 0
    %v916 = vsel %vm890, %v878, 0
    %v919 = vsel %vm890, %v879, 0
    %v922 = vsel %vm890, %v880, 0
    %v925 = vsel %vm890, %v881, 0
    %v928 = vsel %vm890, %v882, 0
    %v931 = vsel %vm890, %v883, 0
    %v934 = vsel %vm890, %v884, 0
    %v937 = vsel %vm890, %v885, 0
    %939 = vmatprep.subr.mxu0 0.0
    %940 = vmatpush1.msra.mxu0 0.0
    %941 = vmatprep.subr.mxu0 0.0
    %942 = vmatpush1.msra.mxu0 0.0
    %943 = vmatprep.subr.mxu0 0.0
    %944 = vmatpush1.msra.mxu0 0.0
    %945 = vmatprep.subr.mxu0 0.0
    %946 = vmatpush1.msra.mxu0 0.0
    %947 = vmatprep.subr.mxu0 0.0
    %948 = vmatpush1.msra.mxu0 0.0
    %949 = vmatprep.subr.mxu0 0.0
    %950 = vmatpush1.msra.mxu0 0.0
    %951 = vmatprep.subr.mxu0 0.0
    %952 = vmatpush1.msra.mxu0 0.0
    %953 = vmatprep.subr.mxu0 0.0
    %954 = vmatpush1.msra.mxu0 0.0
    %955 = vmatprep.subr.mxu0 0.0
    %956 = vmatpush1.msra.mxu0 %v38
    %957 = vmatprep.subr.mxu0 0.0
    %958 = vmatpush1.msra.mxu0 %v37
    %959 = vmatprep.subr.mxu0 0.0
    %960 = vmatpush1.msra.mxu0 %v36
    %961 = vmatprep.subr.mxu0 0.0
    %962 = vmatpush1.msra.mxu0 %v35
    %963 = vmatprep.subr.mxu0 0.0
    %964 = vmatpush1.msra.mxu0 %v34
    %965 = vmatprep.subr.mxu0 0.0
    %966 = vmatpush1.msra.mxu0 %v33
    %967 = vmatprep.subr.mxu0 0.0
    %968 = vmatpush1.msra.mxu0 %v32
    %969 = vmatprep.subr.mxu0 0.0
    %970 = vmatpush1.msra.mxu0 %v31
    %971 = vmatprep.subr.mxu0 0.0
    %972 = vmatpush2.msra.mxu0 0.0
    %973 = vmatprep.subr.mxu0 0.0
    %974 = vmatpush2.msra.mxu0 0.0
    %975 = vmatprep.subr.mxu0 0.0
    %976 = vmatpush2.msra.mxu0 0.0
    %977 = vmatprep.subr.mxu0 0.0
    %978 = vmatpush2.msra.mxu0 0.0
    %979 = vmatprep.subr.mxu0 0.0
    %980 = vmatpush2.msra.mxu0 0.0
    %981 = vmatprep.subr.mxu0 0.0
    %982 = vmatpush2.msra.mxu0 0.0
    %983 = vmatprep.subr.mxu0 0.0
    %984 = vmatpush2.msra.mxu0 0.0
    %985 = vmatprep.subr.mxu0 0.0
    %986 = vmatpush2.msra.mxu0 0.0
    %987 = vmatprep.subr.mxu0 0.0
    %988 = vmatpush2.msra.mxu0 0.0
    %989 = vmatprep.subr.mxu0 0.0
    %990 = vmatpush2.msra.mxu0 0.0
    %991 = vmatprep.subr.mxu0 0.0
    %992 = vmatpush2.msra.mxu0 0.0
    %993 = vmatprep.subr.mxu0 0.0
    %994 = vmatpush2.msra.mxu0 0.0
    %995 = vmatprep.subr.mxu0 0.0
    %996 = vmatpush2.msra.mxu0 0.0
    %997 = vmatprep.subr.mxu0 0.0
    %998 = vmatpush2.msra.mxu0 0.0
    %999 = vmatprep.subr.mxu0 0.0
    %1000 = vmatpush2.msra.mxu0 0.0
    %1001 = vmatprep.subr.mxu0 0.0
    %1002 = vmatpush2.msra.mxu0 0.0
    %1003 = vmatprep.mubr.f32.mxu0 0.0
    %1004 = vmatmul.mubr.f32.gmra.mxu0 %v892
    %v1005 = vpop.f32.mrf.mxu0
    %v1006 = vadd.f32 %v889, %v1005
    %v1007 = vpop.f32.mrf.mxu0
    %1008 = vmatprep.mubr.f32.mxu0 0.0
    %1009 = vmatmul.mubr.f32.gmra.mxu0 %v895
    %v1010 = vpop.f32.mrf.mxu0
    %v1011 = vadd.f32 %v889, %v1010
    %v1012 = vpop.f32.mrf.mxu0
    %1013 = vmatprep.mubr.f32.mxu0 0.0
    %1014 = vmatmul.mubr.f32.gmra.mxu0 %v898
    %v1015 = vpop.f32.mrf.mxu0
    %v1016 = vadd.f32 %v889, %v1015
    %v1017 = vpop.f32.mrf.mxu0
    %1018 = vmatprep.mubr.f32.mxu0 0.0
    %1019 = vmatmul.mubr.f32.gmra.mxu0 %v901
    %v1020 = vpop.f32.mrf.mxu0
    %v1021 = vadd.f32 %v889, %v1020
    %v1022 = vpop.f32.mrf.mxu0
    %1023 = vmatprep.mubr.f32.mxu0 0.0
    %1024 = vmatmul.mubr.f32.gmra.mxu0 %v904
    %v1025 = vpop.f32.mrf.mxu0
    %v1026 = vadd.f32 %v889, %v1025
    %v1027 = vpop.f32.mrf.mxu0
    %1028 = vmatprep.mubr.f32.mxu0 0.0
    %1029 = vmatmul.mubr.f32.gmra.mxu0 %v907
    %v1030 = vpop.f32.mrf.mxu0
    %v1031 = vadd.f32 %v889, %v1030
    %v1032 = vpop.f32.mrf.mxu0
    %1033 = vmatprep.mubr.f32.mxu0 0.0
    %1034 = vmatmul.mubr.f32.gmra.mxu0 %v910
    %v1035 = vpop.f32.mrf.mxu0
    %v1036 = vadd.f32 %v889, %v1035
    %v1037 = vpop.f32.mrf.mxu0
    %1038 = vmatprep.mubr.f32.mxu0 0.0
    %1039 = vmatmul.mubr.f32.gmra.mxu0 %v913
    %v1040 = vpop.f32.mrf.mxu0
    %v1041 = vadd.f32 %v889, %v1040
    %v1042 = vpop.f32.mrf.mxu0
    %1043 = vmatprep.mubr.f32.mxu0 0.0
    %1044 = vmatmul.mubr.f32.gmra.mxu0 %v916
    %v1045 = vpop.f32.mrf.mxu0
    %v1046 = vadd.f32 %v889, %v1045
    %v1047 = vpop.f32.mrf.mxu0
    %1048 = vmatprep.mubr.f32.mxu0 0.0
    %1049 = vmatmul.mubr.f32.gmra.mxu0 %v919
    %v1050 = vpop.f32.mrf.mxu0
    %v1051 = vadd.f32 %v889, %v1050
    %v1052 = vpop.f32.mrf.mxu0
    %1053 = vmatprep.mubr.f32.mxu0 0.0
    %1054 = vmatmul.mubr.f32.gmra.mxu0 %v922
    %v1055 = vpop.f32.mrf.mxu0
    %v1056 = vadd.f32 %v889, %v1055
    %v1057 = vpop.f32.mrf.mxu0
    %1058 = vmatprep.mubr.f32.mxu0 0.0
    %1059 = vmatmul.mubr.f32.gmra.mxu0 %v925
    %v1060 = vpop.f32.mrf.mxu0
    %v1061 = vadd.f32 %v889, %v1060
    %v1062 = vpop.f32.mrf.mxu0
    %1063 = vmatprep.mubr.f32.mxu0 0.0
    %1064 = vmatmul.mubr.f32.gmra.mxu0 %v928
    %v1065 = vpop.f32.mrf.mxu0
    %v1066 = vadd.f32 %v889, %v1065
    %v1067 = vpop.f32.mrf.mxu0
    %1068 = vmatprep.mubr.f32.mxu0 0.0
    %1069 = vmatmul.mubr.f32.gmra.mxu0 %v931
    %v1070 = vpop.f32.mrf.mxu0
    %v1071 = vadd.f32 %v889, %v1070
    %v1072 = vpop.f32.mrf.mxu0
    %1073 = vmatprep.mubr.f32.mxu0 0.0
    %1074 = vmatmul.mubr.f32.gmra.mxu0 %v934
    %v1075 = vpop.f32.mrf.mxu0
    %v1076 = vadd.f32 %v889, %v1075
    %v1077 = vpop.f32.mrf.mxu0
    %1078 = vmatprep.mubr.f32.mxu0 0.0
    %1079 = vmatmul.mubr.f32.gmra.mxu0 %v937
    %v1080 = vpop.f32.mrf.mxu0
    %v1081 = vadd.f32 %v889, %v1080
    %v1082 = vpop.f32.mrf.mxu0
    %1083 = vdwg.mxu0
    %v1084 = vxor.u32 %v1006, 2147483648
    %v1085 = vxor.u32 %v1011, 2147483648
    %v1086 = vxor.u32 %v1016, 2147483648
    %v1087 = vxor.u32 %v1021, 2147483648
    %v1088 = vxor.u32 %v1026, 2147483648
    %v1089 = vxor.u32 %v1031, 2147483648
    %v1090 = vxor.u32 %v1036, 2147483648
    %v1091 = vxor.u32 %v1041, 2147483648
    %v1092 = vxor.u32 %v1046, 2147483648
    %v1093 = vxor.u32 %v1051, 2147483648
    %v1094 = vxor.u32 %v1056, 2147483648
    %v1095 = vxor.u32 %v1061, 2147483648
    %v1096 = vxor.u32 %v1066, 2147483648
    %v1097 = vxor.u32 %v1071, 2147483648
    %v1098 = vxor.u32 %v1076, 2147483648
    %v1099 = vxor.u32 %v1081, 2147483648
    %v1100 = vmul.f32 %v1084, 1.442695
    %v1101 = vpow.pop %v1100
    %v1102 = vmul.f32 %v1085, 1.442695
    %v1103 = vpow.pop %v1102
    %v1104 = vmul.f32 %v1086, 1.442695
    %v1105 = vpow.pop %v1104
    %v1106 = vmul.f32 %v1087, 1.442695
    %v1107 = vpow.pop %v1106
    %v1108 = vmul.f32 %v1088, 1.442695
    %v1109 = vpow.pop %v1108
    %v1110 = vmul.f32 %v1089, 1.442695
    %v1111 = vpow.pop %v1110
    %v1112 = vmul.f32 %v1090, 1.442695
    %v1113 = vpow.pop %v1112
    %v1114 = vmul.f32 %v1091, 1.442695
    %v1115 = vpow.pop %v1114
    %v1116 = vmul.f32 %v1092, 1.442695
    %v1117 = vpow.pop %v1116
    %v1118 = vmul.f32 %v1093, 1.442695
    %v1119 = vpow.pop %v1118
    %v1120 = vmul.f32 %v1094, 1.442695
    %v1121 = vpow.pop %v1120
    %v1122 = vmul.f32 %v1095, 1.442695
    %v1123 = vpow.pop %v1122
    %v1124 = vmul.f32 %v1096, 1.442695
    %v1125 = vpow.pop %v1124
    %v1126 = vmul.f32 %v1097, 1.442695
    %v1127 = vpow.pop %v1126
    %v1128 = vmul.f32 %v1098, 1.442695
    %v1129 = vpow.pop %v1128
    %v1130 = vmul.f32 %v1099, 1.442695
    %v1131 = vpow.pop %v1130
    %v1132 = vadd.f32 %v1101, 1.0
    %v1133 = vadd.f32 %v1103, 1.0
    %v1134 = vadd.f32 %v1105, 1.0
    %v1135 = vadd.f32 %v1107, 1.0
    %v1136 = vadd.f32 %v1109, 1.0
    %v1137 = vadd.f32 %v1111, 1.0
    %v1138 = vadd.f32 %v1113, 1.0
    %v1139 = vadd.f32 %v1115, 1.0
    %v1140 = vadd.f32 %v1117, 1.0
    %v1141 = vadd.f32 %v1119, 1.0
    %v1142 = vadd.f32 %v1121, 1.0
    %v1143 = vadd.f32 %v1123, 1.0
    %v1144 = vadd.f32 %v1125, 1.0
    %v1145 = vadd.f32 %v1127, 1.0
    %v1146 = vadd.f32 %v1129, 1.0
    %v1147 = vadd.f32 %v1131, 1.0
    %v1148 = vrcp.pop %v1132
    %v1149 = vmul.f32 1.0, %v1148
    %v1150 = vrcp.pop %v1133
    %v1151 = vmul.f32 1.0, %v1150
    %v1152 = vrcp.pop %v1134
    %v1153 = vmul.f32 1.0, %v1152
    %v1154 = vrcp.pop %v1135
    %v1155 = vmul.f32 1.0, %v1154
    %v1156 = vrcp.pop %v1136
    %v1157 = vmul.f32 1.0, %v1156
    %v1158 = vrcp.pop %v1137
    %v1159 = vmul.f32 1.0, %v1158
    %v1160 = vrcp.pop %v1138
    %v1161 = vmul.f32 1.0, %v1160
    %v1162 = vrcp.pop %v1139
    %v1163 = vmul.f32 1.0, %v1162
    %v1164 = vrcp.pop %v1140
    %v1165 = vmul.f32 1.0, %v1164
    %v1166 = vrcp.pop %v1141
    %v1167 = vmul.f32 1.0, %v1166
    %v1168 = vrcp.pop %v1142
    %v1169 = vmul.f32 1.0, %v1168
    %v1170 = vrcp.pop %v1143
    %v1171 = vmul.f32 1.0, %v1170
    %v1172 = vrcp.pop %v1144
    %v1173 = vmul.f32 1.0, %v1172
    %v1174 = vrcp.pop %v1145
    %v1175 = vmul.f32 1.0, %v1174
    %v1176 = vrcp.pop %v1146
    %v1177 = vmul.f32 1.0, %v1176
    %v1178 = vrcp.pop %v1147
    %v1179 = vmul.f32 1.0, %v1178
    %v1180 = vmul.f32 %v1149, 2.0
    %v1181 = vmul.f32 %v1151, 2.0
    %v1182 = vmul.f32 %v1153, 2.0
    %v1183 = vmul.f32 %v1155, 2.0
    %v1184 = vmul.f32 %v1157, 2.0
    %v1185 = vmul.f32 %v1159, 2.0
    %v1186 = vmul.f32 %v1161, 2.0
    %v1187 = vmul.f32 %v1163, 2.0
    %v1188 = vmul.f32 %v1165, 2.0
    %v1189 = vmul.f32 %v1167, 2.0
    %v1190 = vmul.f32 %v1169, 2.0
    %v1191 = vmul.f32 %v1171, 2.0
    %v1192 = vmul.f32 %v1173, 2.0
    %v1193 = vmul.f32 %v1175, 2.0
    %v1194 = vmul.f32 %v1177, 2.0
    %v1195 = vmul.f32 %v1179, 2.0
    %v1196 = vsub.f32 %v1180, 1.0
    %v1197 = vsub.f32 %v1181, 1.0
    %v1198 = vsub.f32 %v1182, 1.0
    %v1199 = vsub.f32 %v1183, 1.0
    %v1200 = vsub.f32 %v1184, 1.0
    %v1201 = vsub.f32 %v1185, 1.0
    %v1202 = vsub.f32 %v1186, 1.0
    %v1203 = vsub.f32 %v1187, 1.0
    %v1204 = vsub.f32 %v1188, 1.0
    %v1205 = vsub.f32 %v1189, 1.0
    %v1206 = vsub.f32 %v1190, 1.0
    %v1207 = vsub.f32 %v1191, 1.0
    %v1208 = vsub.f32 %v1192, 1.0
    %v1209 = vsub.f32 %v1193, 1.0
    %v1210 = vsub.f32 %v1194, 1.0
    %v1211 = vsub.f32 %v1195, 1.0
    %1228 = vrot.lane.b32.xlu0 %v1196, 96
    %v1229 = vpop.permute.xlu0 %1228
    %1230 = vrot.lane.b32.xlu0 %v1197, 96
    %v1231 = vpop.permute.xlu0 %1230
    %1232 = vrot.lane.b32.xlu0 %v1198, 96
    %v1233 = vpop.permute.xlu0 %1232
    %1234 = vrot.lane.b32.xlu0 %v1199, 96
    %v1235 = vpop.permute.xlu0 %1234
    %1236 = vrot.lane.b32.xlu0 %v1200, 96
    %v1237 = vpop.permute.xlu0 %1236
    %1238 = vrot.lane.b32.xlu0 %v1201, 96
    %v1239 = vpop.permute.xlu0 %1238
    %1240 = vrot.lane.b32.xlu0 %v1202, 96
    %v1241 = vpop.permute.xlu0 %1240
    %1242 = vrot.lane.b32.xlu0 %v1203, 96
    %v1243 = vpop.permute.xlu0 %1242
    %1244 = vrot.lane.b32.xlu0 %v1204, 96
    %v1245 = vpop.permute.xlu0 %1244
    %1246 = vrot.lane.b32.xlu0 %v1205, 96
    %v1247 = vpop.permute.xlu0 %1246
    %1248 = vrot.lane.b32.xlu0 %v1206, 96
    %v1249 = vpop.permute.xlu0 %1248
    %1250 = vrot.lane.b32.xlu0 %v1207, 96
    %v1251 = vpop.permute.xlu0 %1250
    %1252 = vrot.lane.b32.xlu0 %v1208, 96
    %v1253 = vpop.permute.xlu0 %1252
    %1254 = vrot.lane.b32.xlu0 %v1209, 96
    %v1255 = vpop.permute.xlu0 %1254
    %1256 = vrot.lane.b32.xlu0 %v1210, 96
    %v1257 = vpop.permute.xlu0 %1256
    %1258 = vrot.lane.b32.xlu0 %v1211, 96
    %v1259 = vpop.permute.xlu0 %1258
    %v1276 = vmul.f32 %v1149, %v1229
    %v1277 = vmul.f32 %v1151, %v1231
    %v1278 = vmul.f32 %v1153, %v1233
    %v1279 = vmul.f32 %v1155, %v1235
    %v1280 = vmul.f32 %v1157, %v1237
    %v1281 = vmul.f32 %v1159, %v1239
    %v1282 = vmul.f32 %v1161, %v1241
    %v1283 = vmul.f32 %v1163, %v1243
    %v1284 = vmul.f32 %v1165, %v1245
    %v1285 = vmul.f32 %v1167, %v1247
    %v1286 = vmul.f32 %v1169, %v1249
    %v1287 = vmul.f32 %v1171, %v1251
    %v1288 = vmul.f32 %v1173, %v1253
    %v1289 = vmul.f32 %v1175, %v1255
    %v1290 = vmul.f32 %v1177, %v1257
    %v1291 = vmul.f32 %v1179, %v1259
    %s1292 = sld [smem:[#allocation2]]
    %v1293 = vstv %s1292
    %v1294 = vmul.f32 %v1293, %v1276
    %v1295 = vmul.f32 %v1293, %v1277
    %s1296 = sld [smem:[#allocation2 + $0x1]]
    %v1297 = vstv %s1296
    %v1298 = vmul.f32 %v1297, %v1278
    %v1299 = vmul.f32 %v1297, %v1279
    %v1300 = vadd.f32 %v1294, %v1298
    %v1301 = vadd.f32 %v1295, %v1299
    %s1302 = sld [smem:[#allocation2 + $0x2]]
    %v1303 = vstv %s1302
    %v1304 = vmul.f32 %v1303, %v1280
    %v1305 = vmul.f32 %v1303, %v1281
    %v1306 = vadd.f32 %v1300, %v1304
    %v1307 = vadd.f32 %v1301, %v1305
    %s1308 = sld [smem:[#allocation2 + $0x3]]
    %v1309 = vstv %s1308
    %v1310 = vmul.f32 %v1309, %v1282
    %v1311 = vmul.f32 %v1309, %v1283
    %v1312 = vadd.f32 %v1306, %v1310
    %v1313 = vadd.f32 %v1307, %v1311
    %s1314 = sld [smem:[#allocation2 + $0x4]]
    %v1315 = vstv %s1314
    %v1316 = vmul.f32 %v1315, %v1284
    %v1317 = vmul.f32 %v1315, %v1285
    %v1318 = vadd.f32 %v1312, %v1316
    %v1319 = vadd.f32 %v1313, %v1317
    %s1320 = sld [smem:[#allocation2 + $0x5]]
    %v1321 = vstv %s1320
    %v1322 = vmul.f32 %v1321, %v1286
    %v1323 = vmul.f32 %v1321, %v1287
    %v1324 = vadd.f32 %v1318, %v1322
    %v1325 = vadd.f32 %v1319, %v1323
    %s1326 = sld [smem:[#allocation2 + $0x6]]
    %v1327 = vstv %s1326
    %v1328 = vmul.f32 %v1327, %v1288
    %v1329 = vmul.f32 %v1327, %v1289
    %v1330 = vadd.f32 %v1324, %v1328
    %v1331 = vadd.f32 %v1325, %v1329
    %s1332 = sld [smem:[#allocation2 + $0x7]]
    %v1333 = vstv %s1332
    %v1334 = vmul.f32 %v1333, %v1290
    %v1335 = vmul.f32 %v1333, %v1291
    %v1336 = vadd.f32 %v1330, %v1334
    %v1337 = vadd.f32 %v1331, %v1335
    %v1338 = vmax.f32 %v1336, 0.0
    %v1339 = vmax.f32 %v1337, 0.0
    %v1340 = vlaneseq
    %v1341 = vshrl.u32 %v1340, 7
    %v1342 = vsub.s32 0, %v1341
    %v1343 = vrot.slane %v44, %v1342
    %vm1344 = vcmask 261120
    %v1346 = vsel %vm1344, %v1338, 0
    %v1349 = vsel %vm1344, %v1339, 0
    %1351 = vmatprep.subr.mxu0 0.0
    %1352 = vmatpush1.msra.mxu0 0.0
    %1353 = vmatprep.subr.mxu0 0.0
    %1354 = vmatpush1.msra.mxu0 0.0
    %1355 = vmatprep.subr.mxu0 0.0
    %1356 = vmatpush1.msra.mxu0 0.0
    %1357 = vmatprep.subr.mxu0 0.0
    %1358 = vmatpush1.msra.mxu0 0.0
    %1359 = vmatprep.subr.mxu0 0.0
    %1360 = vmatpush1.msra.mxu0 0.0
    %1361 = vmatprep.subr.mxu0 0.0
    %1362 = vmatpush1.msra.mxu0 0.0
    %1363 = vmatprep.subr.mxu0 0.0
    %1364 = vmatpush1.msra.mxu0 0.0
    %1365 = vmatprep.subr.mxu0 0.0
    %1366 = vmatpush1.msra.mxu0 0.0
    %1367 = vmatprep.subr.mxu0 0.0
    %1368 = vmatpush1.msra.mxu0 0.0
    %1369 = vmatprep.subr.mxu0 0.0
    %1370 = vmatpush1.msra.mxu0 0.0
    %1371 = vmatprep.subr.mxu0 0.0
    %1372 = vmatpush1.msra.mxu0 0.0
    %1373 = vmatprep.subr.mxu0 0.0
    %1374 = vmatpush1.msra.mxu0 0.0
    %1375 = vmatprep.subr.mxu0 0.0
    %1376 = vmatpush1.msra.mxu0 %v43
    %1377 = vmatprep.subr.mxu0 0.0
    %1378 = vmatpush1.msra.mxu0 %v42
    %1379 = vmatprep.subr.mxu0 0.0
    %1380 = vmatpush1.msra.mxu0 %v41
    %1381 = vmatprep.subr.mxu0 0.0
    %1382 = vmatpush1.msra.mxu0 %v40
    %1383 = vmatprep.subr.mxu0 0.0
    %1384 = vmatpush2.msra.mxu0 0.0
    %1385 = vmatprep.subr.mxu0 0.0
    %1386 = vmatpush2.msra.mxu0 0.0
    %1387 = vmatprep.subr.mxu0 0.0
    %1388 = vmatpush2.msra.mxu0 0.0
    %1389 = vmatprep.subr.mxu0 0.0
    %1390 = vmatpush2.msra.mxu0 0.0
    %1391 = vmatprep.subr.mxu0 0.0
    %1392 = vmatpush2.msra.mxu0 0.0
    %1393 = vmatprep.subr.mxu0 0.0
    %1394 = vmatpush2.msra.mxu0 0.0
    %1395 = vmatprep.subr.mxu0 0.0
    %1396 = vmatpush2.msra.mxu0 0.0
    %1397 = vmatprep.subr.mxu0 0.0
    %1398 = vmatpush2.msra.mxu0 0.0
    %1399 = vmatprep.subr.mxu0 0.0
    %1400 = vmatpush2.msra.mxu0 0.0
    %1401 = vmatprep.subr.mxu0 0.0
    %1402 = vmatpush2.msra.mxu0 0.0
    %1403 = vmatprep.subr.mxu0 0.0
    %1404 = vmatpush2.msra.mxu0 0.0
    %1405 = vmatprep.subr.mxu0 0.0
    %1406 = vmatpush2.msra.mxu0 0.0
    %1407 = vmatprep.subr.mxu0 0.0
    %1408 = vmatpush2.msra.mxu0 0.0
    %1409 = vmatprep.subr.mxu0 0.0
    %1410 = vmatpush2.msra.mxu0 0.0
    %1411 = vmatprep.subr.mxu0 0.0
    %1412 = vmatpush2.msra.mxu0 0.0
    %1413 = vmatprep.subr.mxu0 0.0
    %1414 = vmatpush2.msra.mxu0 0.0
    %1415 = vmatprep.mubr.f32.mxu0 0.0
    %1416 = vmatmul.mubr.f32.gmra.mxu0 %v1346
    %v1417 = vpop.f32.mrf.mxu0
    %v1418 = vadd.f32 %v1343, %v1417
    %v1419 = vpop.f32.mrf.mxu0
    %1420 = vmatprep.mubr.f32.mxu0 0.0
    %1421 = vmatmul.mubr.f32.gmra.mxu0 %v1349
    %v1422 = vpop.f32.mrf.mxu0
    %v1423 = vadd.f32 %v1343, %v1422
    %v1424 = vpop.f32.mrf.mxu0
    %1425 = vdwg.mxu0
    %1426 = vst [vmem:[%s3] sm:$0xff] %v1418
    %1427 = vst [vmem:[%s3 + $0x8] sm:$0xff] %v1423
    // Predicated region
    $region18: #{temporal_gnn_forward.1} parent=1 // pred_check
      _
    $region19: #{temporal_gnn_forward.1} parent=1 // pred_check_branch
      %1429 = sbr.rel (0) target = $region21
    $region20: #{temporal_gnn_forward.1} parent=1 // pred_region
      _
    $region21: #{temporal_gnn_forward.1} parent=1 // pred_fallthru
      _
    // Predicated region
    $region22: #{temporal_gnn_forward.1} parent=1 // pred_check
      _
    $region23: #{temporal_gnn_forward.1} parent=1 // pred_check_branch
      %1431 = sbr.rel (0) target = $region25
    $region24: #{temporal_gnn_forward.1} parent=1 // pred_region
      _
    $region25: #{temporal_gnn_forward.1} parent=1 // pred_fallthru
      _
    %1432 = vsyncpa [#allocation3], 1

</llo_original>
